<compile_context>
chip_gen: v7x
topology: tpu7x:2x2x1
jax: 0.10.0
libtpu: 0.0.40
codegen_flags: <defaults>
</compile_context>

<pallas_src>
import functools

import jax
import jax.numpy as jnp
import numpy as np
from jax.experimental import pallas as pl
from jax.experimental.pallas import tpu as pltpu


# ----------------------------- Pallas kernel -------------------------------

def _conv_bn_relu_kernel(taps_ref, w_ref, scale_ref, bias_ref, o_ref, *,
                         pool, hwo):
    # taps_ref : (1, Kp, HW)   bf16 im2col columns (spatial in the lane dim)
    # w_ref    : (Cp, Kp)      bf16 conv weights, K = 9*Cin (padded)
    # scale_ref: (Cp, 1)       f32 folded BatchNorm scale
    # bias_ref : (Cp, 1)       f32 folded BatchNorm + conv bias
    # o_ref    : (1, Cp, HW)   or (1, Cp, HW//4) when pool=True
    acc = jnp.dot(w_ref[...], taps_ref[0],
                  preferred_element_type=jnp.float32)             # (Cp, HW) f32
    acc = jnp.maximum(acc * scale_ref[...] + bias_ref[...], 0.0)  # BN + ReLU
    if pool:
        # Columns were pre-permuted so the 4 positions of each 2x2 window sit
        # in 4 contiguous width-hwo slices -> pooling = 3 elementwise maxes.
        acc = jnp.maximum(
            jnp.maximum(acc[:, 0 * hwo:1 * hwo], acc[:, 1 * hwo:2 * hwo]),
            jnp.maximum(acc[:, 2 * hwo:3 * hwo], acc[:, 3 * hwo:4 * hwo]))
    o_ref[0] = acc


# ----------------------------- wrapper glue ---------------------------------

def _round_up(x, m):
    return (x + m - 1) // m * m


def _im2col_nchw(x_nchw):
    """(N, C, H, W) -> (N, 9*C, H*W), K ordered as (kh, kw, cin)."""
    N, C, H, W = x_nchw.shape
    xp = jnp.pad(x_nchw, ((0, 0), (0, 0), (1, 1), (1, 1)))
    taps = jnp.concatenate(
        [xp[:, :, kh:kh + H, kw:kw + W] for kh in range(3) for kw in range(3)],
        axis=1)                                            # (N, 9C, H, W)
    return taps.reshape(N, 9 * C, H * W)


def _pool_perm(H, W):
    """Column order grouping the 4 positions of each 2x2 window into 4
    contiguous blocks of length (H//2)*(W//2), each in row-major pooled order."""
    Ho, Wo = H // 2, W // 2
    ho, wo = np.meshgrid(np.arange(Ho), np.arange(Wo), indexing="ij")
    base = (2 * ho * W + 2 * wo).reshape(-1)               # (Ho*Wo,)
    offs = np.array([0, 1, W, W + 1])                      # (0,0)(0,1)(1,0)(1,1)
    return jnp.asarray((offs[:, None] + base[None, :]).reshape(-1), jnp.int32)


def conv_bn_relu(x_nchw, params, *, pool, eps=1e-5):
    """Conv2d(3x3, pad=1) + BatchNorm(inference) + ReLU (+ fused MaxPool2x2).

    Input and output are NCHW float32; one pallas_call per layer."""
    w_oihw, conv_b, gamma, beta, mean, var = params
    N, Cin, H, W = x_nchw.shape
    Cout = w_oihw.shape[0]
    HW = H * W
    K = 9 * Cin
    Kp = _round_up(K, 8)
    Cp = _round_up(Cout, 8)

    # im2col (single materialization, contiguous K), window-grouped if pooling.
    taps = _im2col_nchw(x_nchw)                                   # (N, K, HW)
    if pool:
        taps = jnp.take(taps, _pool_perm(H, W), axis=2)
    taps = jnp.pad(taps, ((0, 0), (0, Kp - K), (0, 0))).astype(jnp.bfloat16)

    # Weights -> (Cout, 9*Cin) matching the tap ordering; pad; bf16.
    w2 = jnp.transpose(w_oihw, (0, 2, 3, 1)).reshape(Cout, K)
    w2 = jnp.pad(w2, ((0, Cp - Cout), (0, Kp - K))).astype(jnp.bfloat16)

    # Fold BatchNorm into per-channel scale / bias (f32 epilogue).
    s = gamma / jnp.sqrt(var + eps)
    bias_eff = (conv_b - mean) * s + beta
    s = jnp.pad(s, (0, Cp - Cout)).reshape(Cp, 1).astype(jnp.float32)
    bias_eff = jnp.pad(bias_eff, (0, Cp - Cout)).reshape(Cp, 1).astype(jnp.float32)

    hw_out = HW // 4 if pool else HW
    kernel = functools.partial(_conv_bn_relu_kernel, pool=pool, hwo=HW // 4)

    out = pl.pallas_call(
        kernel,
        out_shape=jax.ShapeDtypeStruct((N, Cp, hw_out), jnp.float32),
        grid=(N,),
        in_specs=[
            pl.BlockSpec((1, Kp, HW), lambda n: (n, 0, 0)),
            pl.BlockSpec((Cp, Kp), lambda n: (0, 0)),
            pl.BlockSpec((Cp, 1), lambda n: (0, 0)),
            pl.BlockSpec((Cp, 1), lambda n: (0, 0)),
        ],
        out_specs=pl.BlockSpec((1, Cp, hw_out), lambda n: (n, 0, 0)),
        compiler_params=pltpu.CompilerParams(
            dimension_semantics=("parallel",)),
    )(taps, w2, s, bias_eff)

    Ho, Wo = (H // 2, W // 2) if pool else (H, W)
    return out[:, :Cout, :].reshape(N, Cout, Ho, Wo)


def spafe_forward(x_nchw, p1, p2, p3a, p3b):
    """Pallas implementation of SpaFE.forward; returns [x1, x2, x3] in NCHW."""
    x1 = conv_bn_relu(x_nchw, p1, pool=False)
    # layer_2's conv and layer_3's first conv consume the same input: run them
    # as a single pallas_call by concatenating their output channels.
    c2 = p2[0].shape[0]
    p23 = tuple(jnp.concatenate([a, b], axis=0) for a, b in zip(p2, p3a))
    y = conv_bn_relu(x_nchw, p23, pool=True)
    x2 = y[:, :c2]
    t = y[:, c2:]
    x3 = conv_bn_relu(t, p3b, pool=True)
    return [x1, x2, x3]


# ----------------------------- reference (plain JAX) ------------------------

def _ref_conv_bn_relu(x, w, b, gamma, beta, mean, var, eps=1e-5):
    s = gamma / jnp.sqrt(var + eps)
    y = jax.lax.conv_general_dilated(
        x, w, (1, 1), "SAME", dimension_numbers=("NCHW", "OIHW", "NCHW"))
    y = (y + b[None, :, None, None]) * s[None, :, None, None] \
        + (beta - mean * s)[None, :, None, None]
    return jnp.maximum(y, 0.0)


def _ref_pool(x):
    N, C, H, W = x.shape
    return x.reshape(N, C, H // 2, 2, W // 2, 2).max(axis=(3, 5))


def _ref_forward(x, p1, p2, p3a, p3b):
    x1 = _ref_conv_bn_relu(x, *p1)
    x2 = _ref_pool(_ref_conv_bn_relu(x, *p2))
    t = _ref_pool(_ref_conv_bn_relu(x, *p3a))
    x3 = _ref_pool(_ref_conv_bn_relu(t, *p3b))
    return [x1, x2, x3]


# ----------------------------- params & main --------------------------------

def make_conv_bn_params(key, cin, cout):
    k1, k2, k3, k4, k5, k6 = jax.random.split(key, 6)
    fan_in = cin * 9
    bound = 1.0 / (fan_in ** 0.5)
    w = jax.random.uniform(k1, (cout, cin, 3, 3), jnp.float32, -bound, bound)
    b = jax.random.uniform(k2, (cout,), jnp.float32, -bound, bound)
    gamma = 1.0 + 0.1 * jax.random.normal(k3, (cout,), jnp.float32)
    beta = 0.1 * jax.random.normal(k4, (cout,), jnp.float32)
    mean = 0.1 * jax.random.normal(k5, (cout,), jnp.float32)
    var = jnp.abs(jax.random.normal(k6, (cout,), jnp.float32)) + 0.5
    return (w, b, gamma, beta, mean, var)


if __name__ == "__main__":
    n_fts = 31
    N, H, W = 2, 16, 16

    key = jax.random.PRNGKey(0)
    kx, k1, k2, k3a, k3b = jax.random.split(key, 5)
    x = jax.random.normal(kx, (N, 3, H, W), jnp.float32)

    p1 = make_conv_bn_params(k1, 3, n_fts)                 # layer_1 conv
    p2 = make_conv_bn_params(k2, 3, 2 * n_fts)             # layer_2 conv
    p3a = make_conv_bn_params(k3a, 3, 2 * n_fts)           # layer_3 conv #1
    p3b = make_conv_bn_params(k3b, 2 * n_fts, 4 * n_fts)   # layer_3 conv #2

    fwd = jax.jit(spafe_forward)
    outs = jax.block_until_ready(fwd(x, p1, p2, p3a, p3b))

    assert outs[0].shape == (N, n_fts, H, W)
    assert outs[1].shape == (N, 2 * n_fts, H // 2, W // 2)
    assert outs[2].shape == (N, 4 * n_fts, H // 4, W // 4)

    refs = jax.block_until_ready(_ref_forward(x, p1, p2, p3a, p3b))
    for o, r in zip(outs, refs):
        err = float(jnp.max(jnp.abs(o - r)))
        # bf16 matmul inputs with f32 accumulation: small, bounded deviation.
        assert err < 2e-2, f"mismatch vs reference: {err}"

    print("KERNEL_OK")
</pallas_src>

<mosaic_0001>
module attributes {stable_mosaic.version = 11 : i64} {
  func.func @_conv_bn_relu_kernel(%arg0: i32, %arg1: memref<1x32x256xbf16, #tpu.memory_space<vmem>>, %arg2: memref<128x32xbf16, #tpu.memory_space<vmem>>, %arg3: memref<128x1xf32, #tpu.memory_space<vmem>>, %arg4: memref<128x1xf32, #tpu.memory_space<vmem>>, %arg5: memref<1x128x64xf32, #tpu.memory_space<vmem>>) attributes {dimension_semantics = [#tpu.dimension_semantics<parallel>], iteration_bounds = array<i64: 2>, scalar_prefetch = 0 : i64, scratch_operands = 0 : i64, tpu.core_type = #tpu.core_type<tc>, window_params = [{transform_indices = @transform_0, window_bounds = array<i64: 1, 32, 256>}, {pipeline_mode = #tpu.pipeline_mode<synchronous>, transform_indices = @transform_1, window_bounds = array<i64: 128, 32>}, {pipeline_mode = #tpu.pipeline_mode<synchronous>, transform_indices = @transform_2, window_bounds = array<i64: 128, 1>}, {pipeline_mode = #tpu.pipeline_mode<synchronous>, transform_indices = @transform_3, window_bounds = array<i64: 128, 1>}, {transform_indices = @transform_4, window_bounds = array<i64: 1, 128, 64>}]} {
    %c0 = arith.constant 0 : index
    %c0_0 = arith.constant 0 : index
    %0 = vector.load %arg2[%c0, %c0_0] : memref<128x32xbf16, #tpu.memory_space<vmem>>, vector<128x32xbf16>
    %c0_1 = arith.constant 0 : index
    %c0_2 = arith.constant 0 : index
    %c0_3 = arith.constant 0 : index
    %1 = vector.load %arg1[%c0_1, %c0_2, %c0_3] : memref<1x32x256xbf16, #tpu.memory_space<vmem>>, vector<1x32x256xbf16>
    %2 = vector.shape_cast %1 : vector<1x32x256xbf16> to vector<32x256xbf16>
    %cst = arith.constant dense<0.000000e+00> : vector<128x256xf32>
    %3 = tpu.matmul %0, %2, %cst {dimension_numbers = #tpu.dot_dimension_numbers<[1], [0], [0], [1], [0, 0, 1, 1], [], []>} : vector<128x32xbf16>, vector<32x256xbf16>, vector<128x256xf32> -> vector<128x256xf32>
    %c0_4 = arith.constant 0 : index
    %c0_5 = arith.constant 0 : index
    %4 = vector.load %arg3[%c0_4, %c0_5] : memref<128x1xf32, #tpu.memory_space<vmem>>, vector<128x1xf32>
    %5 = vector.broadcast %4 : vector<128x1xf32> to vector<128x256xf32>
    %6 = arith.mulf %3, %5 : vector<128x256xf32>
    %c0_6 = arith.constant 0 : index
    %c0_7 = arith.constant 0 : index
    %7 = vector.load %arg4[%c0_6, %c0_7] : memref<128x1xf32, #tpu.memory_space<vmem>>, vector<128x1xf32>
    %8 = vector.broadcast %7 : vector<128x1xf32> to vector<128x256xf32>
    %9 = arith.addf %6, %8 : vector<128x256xf32>
    %cst_8 = arith.constant 0.000000e+00 : f32
    %10 = vector.broadcast %cst_8 : f32 to vector<128x256xf32>
    %11 = arith.maximumf %9, %10 : vector<128x256xf32>
    %12 = vector.extract_strided_slice %11 {offsets = [0, 0], sizes = [128, 64], strides = [1, 1]} : vector<128x256xf32> to vector<128x64xf32>
    %13 = vector.extract_strided_slice %11 {offsets = [0, 64], sizes = [128, 64], strides = [1, 1]} : vector<128x256xf32> to vector<128x64xf32>
    %14 = arith.maximumf %12, %13 : vector<128x64xf32>
    %15 = vector.extract_strided_slice %11 {offsets = [0, 128], sizes = [128, 64], strides = [1, 1]} : vector<128x256xf32> to vector<128x64xf32>
    %16 = vector.extract_strided_slice %11 {offsets = [0, 192], sizes = [128, 64], strides = [1, 1]} : vector<128x256xf32> to vector<128x64xf32>
    %17 = arith.maximumf %15, %16 : vector<128x64xf32>
    %18 = arith.maximumf %14, %17 : vector<128x64xf32>
    %c0_9 = arith.constant 0 : index
    %c0_10 = arith.constant 0 : index
    %c0_11 = arith.constant 0 : index
    %19 = vector.load %arg5[%c0_9, %c0_10, %c0_11] : memref<1x128x64xf32, #tpu.memory_space<vmem>>, vector<1x128x64xf32>
    %20 = vector.shape_cast %19 : vector<1x128x64xf32> to vector<128x64xf32>
    %21 = vector.shape_cast %18 : vector<128x64xf32> to vector<1x128x64xf32>
    tpu.vector_store %arg5[%c0_9, %c0_10, %c0_11], %21 {strides = array<i32>} : memref<1x128x64xf32, #tpu.memory_space<vmem>>, vector<1x128x64xf32>,
    return
  }
  func.func @transform_0(%arg0: i32) -> (i32, i32, i32) {
    %c0_i32 = arith.constant 0 : i32
    %c0_i32_0 = arith.constant 0 : i32
    %c0_i32_1 = arith.constant 0 : i32
    return %arg0, %c0_i32, %c0_i32_0 : i32, i32, i32
  }
  func.func @transform_1(%arg0: i32) -> (i32, i32) {
    %c0_i32 = arith.constant 0 : i32
    %c0_i32_0 = arith.constant 0 : i32
    %c0_i32_1 = arith.constant 0 : i32
    return %c0_i32, %c0_i32_0 : i32, i32
  }
  func.func @transform_2(%arg0: i32) -> (i32, i32) {
    %c0_i32 = arith.constant 0 : i32
    %c0_i32_0 = arith.constant 0 : i32
    %c0_i32_1 = arith.constant 0 : i32
    return %c0_i32, %c0_i32_0 : i32, i32
  }
  func.func @transform_3(%arg0: i32) -> (i32, i32) {
    %c0_i32 = arith.constant 0 : i32
    %c0_i32_0 = arith.constant 0 : i32
    %c0_i32_1 = arith.constant 0 : i32
    return %c0_i32, %c0_i32_0 : i32, i32
  }
  func.func @transform_4(%arg0: i32) -> (i32, i32, i32) {
    %c0_i32 = arith.constant 0 : i32
    %c0_i32_0 = arith.constant 0 : i32
    %c0_i32_1 = arith.constant 0 : i32
    return %arg0, %c0_i32, %c0_i32_0 : i32, i32, i32
  }
}

module attributes {stable_mosaic.version = 11 : i64} {
  func.func @_conv_bn_relu_kernel(%arg0: i32, %arg1: memref<1x560x64xbf16, #tpu.memory_space<vmem>>, %arg2: memref<128x560xbf16, #tpu.memory_space<vmem>>, %arg3: memref<128x1xf32, #tpu.memory_space<vmem>>, %arg4: memref<128x1xf32, #tpu.memory_space<vmem>>, %arg5: memref<1x128x16xf32, #tpu.memory_space<vmem>>) attributes {dimension_semantics = [#tpu.dimension_semantics<parallel>], iteration_bounds = array<i64: 2>, scalar_prefetch = 0 : i64, scratch_operands = 0 : i64, tpu.core_type = #tpu.core_type<tc>, window_params = [{transform_indices = @transform_0, window_bounds = array<i64: 1, 560, 64>}, {pipeline_mode = #tpu.pipeline_mode<synchronous>, transform_indices = @transform_1, window_bounds = array<i64: 128, 560>}, {pipeline_mode = #tpu.pipeline_mode<synchronous>, transform_indices = @transform_2, window_bounds = array<i64: 128, 1>}, {pipeline_mode = #tpu.pipeline_mode<synchronous>, transform_indices = @transform_3, window_bounds = array<i64: 128, 1>}, {transform_indices = @transform_4, window_bounds = array<i64: 1, 128, 16>}]} {
    %c0 = arith.constant 0 : index
    %c0_0 = arith.constant 0 : index
    %0 = vector.load %arg2[%c0, %c0_0] : memref<128x560xbf16, #tpu.memory_space<vmem>>, vector<128x560xbf16>
    %c0_1 = arith.constant 0 : index
    %c0_2 = arith.constant 0 : index
    %c0_3 = arith.constant 0 : index
    %1 = vector.load %arg1[%c0_1, %c0_2, %c0_3] : memref<1x560x64xbf16, #tpu.memory_space<vmem>>, vector<1x560x64xbf16>
    %2 = vector.shape_cast %1 : vector<1x560x64xbf16> to vector<560x64xbf16>
    %cst = arith.constant dense<0.000000e+00> : vector<128x64xf32>
    %3 = tpu.matmul %0, %2, %cst {dimension_numbers = #tpu.dot_dimension_numbers<[1], [0], [0], [1], [0, 0, 1, 1], [], []>} : vector<128x560xbf16>, vector<560x64xbf16>, vector<128x64xf32> -> vector<128x64xf32>
    %c0_4 = arith.constant 0 : index
    %c0_5 = arith.constant 0 : index
    %4 = vector.load %arg3[%c0_4, %c0_5] : memref<128x1xf32, #tpu.memory_space<vmem>>, vector<128x1xf32>
    %5 = vector.broadcast %4 : vector<128x1xf32> to vector<128x64xf32>
    %6 = arith.mulf %3, %5 : vector<128x64xf32>
    %c0_6 = arith.constant 0 : index
    %c0_7 = arith.constant 0 : index
    %7 = vector.load %arg4[%c0_6, %c0_7] : memref<128x1xf32, #tpu.memory_space<vmem>>, vector<128x1xf32>
    %8 = vector.broadcast %7 : vector<128x1xf32> to vector<128x64xf32>
    %9 = arith.addf %6, %8 : vector<128x64xf32>
    %cst_8 = arith.constant 0.000000e+00 : f32
    %10 = vector.broadcast %cst_8 : f32 to vector<128x64xf32>
    %11 = arith.maximumf %9, %10 : vector<128x64xf32>
    %12 = vector.extract_strided_slice %11 {offsets = [0, 0], sizes = [128, 16], strides = [1, 1]} : vector<128x64xf32> to vector<128x16xf32>
    %13 = vector.extract_strided_slice %11 {offsets = [0, 16], sizes = [128, 16], strides = [1, 1]} : vector<128x64xf32> to vector<128x16xf32>
    %14 = arith.maximumf %12, %13 : vector<128x16xf32>
    %15 = vector.extract_strided_slice %11 {offsets = [0, 32], sizes = [128, 16], strides = [1, 1]} : vector<128x64xf32> to vector<128x16xf32>
    %16 = vector.extract_strided_slice %11 {offsets = [0, 48], sizes = [128, 16], strides = [1, 1]} : vector<128x64xf32> to vector<128x16xf32>
    %17 = arith.maximumf %15, %16 : vector<128x16xf32>
    %18 = arith.maximumf %14, %17 : vector<128x16xf32>
    %c0_9 = arith.constant 0 : index
    %c0_10 = arith.constant 0 : index
    %c0_11 = arith.constant 0 : index
    %19 = vector.load %arg5[%c0_9, %c0_10, %c0_11] : memref<1x128x16xf32, #tpu.memory_space<vmem>>, vector<1x128x16xf32>
    %20 = vector.shape_cast %19 : vector<1x128x16xf32> to vector<128x16xf32>
    %21 = vector.shape_cast %18 : vector<128x16xf32> to vector<1x128x16xf32>
    tpu.vector_store %arg5[%c0_9, %c0_10, %c0_11], %21 {strides = array<i32>} : memref<1x128x16xf32, #tpu.memory_space<vmem>>, vector<1x128x16xf32>,
    return
  }
  func.func @transform_0(%arg0: i32) -> (i32, i32, i32) {
    %c0_i32 = arith.constant 0 : i32
    %c0_i32_0 = arith.constant 0 : i32
    %c0_i32_1 = arith.constant 0 : i32
    return %arg0, %c0_i32, %c0_i32_0 : i32, i32, i32
  }
  func.func @transform_1(%arg0: i32) -> (i32, i32) {
    %c0_i32 = arith.constant 0 : i32
    %c0_i32_0 = arith.constant 0 : i32
    %c0_i32_1 = arith.constant 0 : i32
    return %c0_i32, %c0_i32_0 : i32, i32
  }
  func.func @transform_2(%arg0: i32) -> (i32, i32) {
    %c0_i32 = arith.constant 0 : i32
    %c0_i32_0 = arith.constant 0 : i32
    %c0_i32_1 = arith.constant 0 : i32
    return %c0_i32, %c0_i32_0 : i32, i32
  }
  func.func @transform_3(%arg0: i32) -> (i32, i32) {
    %c0_i32 = arith.constant 0 : i32
    %c0_i32_0 = arith.constant 0 : i32
    %c0_i32_1 = arith.constant 0 : i32
    return %c0_i32, %c0_i32_0 : i32, i32
  }
  func.func @transform_4(%arg0: i32) -> (i32, i32, i32) {
    %c0_i32 = arith.constant 0 : i32
    %c0_i32_0 = arith.constant 0 : i32
    %c0_i32_1 = arith.constant 0 : i32
    return %arg0, %c0_i32, %c0_i32_0 : i32, i32, i32
  }
}

module attributes {stable_mosaic.version = 11 : i64} {
  func.func @_conv_bn_relu_kernel(%arg0: i32, %arg1: memref<1x32x256xbf16, #tpu.memory_space<vmem>>, %arg2: memref<32x32xbf16, #tpu.memory_space<vmem>>, %arg3: memref<32x1xf32, #tpu.memory_space<vmem>>, %arg4: memref<32x1xf32, #tpu.memory_space<vmem>>, %arg5: memref<1x32x256xf32, #tpu.memory_space<vmem>>) attributes {dimension_semantics = [#tpu.dimension_semantics<parallel>], iteration_bounds = array<i64: 2>, scalar_prefetch = 0 : i64, scratch_operands = 0 : i64, tpu.core_type = #tpu.core_type<tc>, window_params = [{transform_indices = @transform_0, window_bounds = array<i64: 1, 32, 256>}, {pipeline_mode = #tpu.pipeline_mode<synchronous>, transform_indices = @transform_1, window_bounds = array<i64: 32, 32>}, {pipeline_mode = #tpu.pipeline_mode<synchronous>, transform_indices = @transform_2, window_bounds = array<i64: 32, 1>}, {pipeline_mode = #tpu.pipeline_mode<synchronous>, transform_indices = @transform_3, window_bounds = array<i64: 32, 1>}, {transform_indices = @transform_4, window_bounds = array<i64: 1, 32, 256>}]} {
    %c0 = arith.constant 0 : index
    %c0_0 = arith.constant 0 : index
    %0 = vector.load %arg2[%c0, %c0_0] : memref<32x32xbf16, #tpu.memory_space<vmem>>, vector<32x32xbf16>
    %c0_1 = arith.constant 0 : index
    %c0_2 = arith.constant 0 : index
    %c0_3 = arith.constant 0 : index
    %1 = vector.load %arg1[%c0_1, %c0_2, %c0_3] : memref<1x32x256xbf16, #tpu.memory_space<vmem>>, vector<1x32x256xbf16>
    %2 = vector.shape_cast %1 : vector<1x32x256xbf16> to vector<32x256xbf16>
    %cst = arith.constant dense<0.000000e+00> : vector<32x256xf32>
    %3 = tpu.matmul %0, %2, %cst {dimension_numbers = #tpu.dot_dimension_numbers<[1], [0], [0], [1], [0, 0, 1, 1], [], []>} : vector<32x32xbf16>, vector<32x256xbf16>, vector<32x256xf32> -> vector<32x256xf32>
    %c0_4 = arith.constant 0 : index
    %c0_5 = arith.constant 0 : index
    %4 = vector.load %arg3[%c0_4, %c0_5] : memref<32x1xf32, #tpu.memory_space<vmem>>, vector<32x1xf32>
    %5 = vector.broadcast %4 : vector<32x1xf32> to vector<32x256xf32>
    %6 = arith.mulf %3, %5 : vector<32x256xf32>
    %c0_6 = arith.constant 0 : index
    %c0_7 = arith.constant 0 : index
    %7 = vector.load %arg4[%c0_6, %c0_7] : memref<32x1xf32, #tpu.memory_space<vmem>>, vector<32x1xf32>
    %8 = vector.broadcast %7 : vector<32x1xf32> to vector<32x256xf32>
    %9 = arith.addf %6, %8 : vector<32x256xf32>
    %cst_8 = arith.constant 0.000000e+00 : f32
    %10 = vector.broadcast %cst_8 : f32 to vector<32x256xf32>
    %11 = arith.maximumf %9, %10 : vector<32x256xf32>
    %c0_9 = arith.constant 0 : index
    %c0_10 = arith.constant 0 : index
    %c0_11 = arith.constant 0 : index
    %12 = vector.load %arg5[%c0_9, %c0_10, %c0_11] : memref<1x32x256xf32, #tpu.memory_space<vmem>>, vector<1x32x256xf32>
    %13 = vector.shape_cast %12 : vector<1x32x256xf32> to vector<32x256xf32>
    %14 = vector.shape_cast %11 : vector<32x256xf32> to vector<1x32x256xf32>
    tpu.vector_store %arg5[%c0_9, %c0_10, %c0_11], %14 {strides = array<i32>} : memref<1x32x256xf32, #tpu.memory_space<vmem>>, vector<1x32x256xf32>,
    return
  }
  func.func @transform_0(%arg0: i32) -> (i32, i32, i32) {
    %c0_i32 = arith.constant 0 : i32
    %c0_i32_0 = arith.constant 0 : i32
    %c0_i32_1 = arith.constant 0 : i32
    return %arg0, %c0_i32, %c0_i32_0 : i32, i32, i32
  }
  func.func @transform_1(%arg0: i32) -> (i32, i32) {
    %c0_i32 = arith.constant 0 : i32
    %c0_i32_0 = arith.constant 0 : i32
    %c0_i32_1 = arith.constant 0 : i32
    return %c0_i32, %c0_i32_0 : i32, i32
  }
  func.func @transform_2(%arg0: i32) -> (i32, i32) {
    %c0_i32 = arith.constant 0 : i32
    %c0_i32_0 = arith.constant 0 : i32
    %c0_i32_1 = arith.constant 0 : i32
    return %c0_i32, %c0_i32_0 : i32, i32
  }
  func.func @transform_3(%arg0: i32) -> (i32, i32) {
    %c0_i32 = arith.constant 0 : i32
    %c0_i32_0 = arith.constant 0 : i32
    %c0_i32_1 = arith.constant 0 : i32
    return %c0_i32, %c0_i32_0 : i32, i32
  }
  func.func @transform_4(%arg0: i32) -> (i32, i32, i32) {
    %c0_i32 = arith.constant 0 : i32
    %c0_i32_0 = arith.constant 0 : i32
    %c0_i32_1 = arith.constant 0 : i32
    return %arg0, %c0_i32, %c0_i32_0 : i32, i32, i32
  }
}

</mosaic_0001>

<llo_original>
// kernel: spafe_forward.4
$region0: #{spafe_forward.4}
  #allocation0 [shape = 'u32[]', space=smem, size = 0x4, offset = 0x4, fixed_abs, tag = 'smem constant byte address 0x4 - core index']
  #allocation1 [shape = 'u32[144,128]{1,0:T(1,128)}', space=vmem, size = 0x12000, scoped, tag = 'internal scratch']
  %s0 = inlined_call_operand.vmem [shape: bf16[2,32,256], index: 0, kind: input, shape index: {}]
  %s1 = inlined_call_operand.vmem [shape: bf16[128,32], index: 1, kind: input, shape index: {}]
  %s2 = inlined_call_operand.vmem [shape: f32[128,1], index: 2, kind: input, shape index: {}]
  %s3 = inlined_call_operand.vmem [shape: f32[128,1], index: 3, kind: input, shape index: {}]
  %s4 = inlined_call_operand.vmem [shape: f32[2,128,64], index: 4, kind: output, shape index: {}]
  %s5 = sld [smem:[#allocation0]]
  $region49: #{spafe_forward.4} parent=0
    _
  %s7 = ssub.s32 1, %s5
  %s8 = scalar_select 0, %s7, %s5
  loop: start=0, step=1, limit=4
  $region2: #{spafe_forward.4} parent=0 // loop_pre_header
    _
  $region3: #{spafe_forward.4} parent=0 // loop_header
    %s10 = sphi 0, %s14
    %p11 = scmp.ge.s32.totalorder %s10, 4
    %s20 = sphi 0, %s22
    %s23 = sphi 0, %s20
    %s24 = sphi 0, %s23
    %s40 = sphi 0, %s24
    %s44 = sphi 0, %s44
    %s46 = sphi 0, %s44
    %s47 = sphi 0, %s46
    %s61 = sphi 0, %s47
    %s65 = sphi 0, %s65
    %s67 = sphi 0, %s65
    %s68 = sphi 0, %s67
    %s82 = sphi 0, %s68
    %s86 = sphi 0, %s86
    %s88 = sphi 0, %s86
    %s89 = sphi 0, %s88
    %s103 = sphi 0, %s89
    %s109 = sphi 0, %s111
    %s112 = sphi 0, %s109
    %s113 = sphi 0, %s112
    %s129 = sphi 0, %s113
  $region4: #{spafe_forward.4} parent=0 // loop_header_branch
    %13 = sbr.rel (%p11) target = $region8
  $region5: #{spafe_forward.4} parent=0 // loop_body
    %s15 = ssub.s32 %s10, 1
    %s16 = ssub.s32 %s10, 2
    %s17 = sadd.s32 %s10, 1
    %s18 = ssub.s32 %s10, %s17
    %p19 = scmp.eq.s32.totalorder %s18, 0
    %s21 = sadd.s32 %s20, 1
    %s22 = scalar_select %p19, %s20, %s21
    %p25 = pneg %p19
    %p26 = scmp.eq.s32.totalorder %s10, 1
    %p27 = por %p25, %p26
    %p28 = scmp.ne.s32.totalorder %s20, %s23
    %p29 = scmp.eq.s32.totalorder %s10, 0
    %p30 = por %p28, %p29
    %p31 = scmp.ne.s32.totalorder %s20, %s23
    %p32 = scmp.eq.s32.totalorder %s15, 1
    %p33 = por %p31, %p32
    %p34 = scmp.ne.s32.totalorder %s23, %s24
    %p35 = scmp.eq.s32.totalorder %s15, 0
    %p36 = por %p34, %p35
    %p37 = scmp.ne.s32.totalorder %s23, %s24
    %p38 = scmp.eq.s32.totalorder %s16, 1
    %p39 = por %p37, %p38
    %p41 = scmp.ne.s32.totalorder %s24, %s40
    %p42 = scmp.eq.s32.totalorder %s16, 0
    %p43 = por %p41, %p42
    %s45 = sadd.s32 %s44, 1
    %p48 = scmp.eq.s32.totalorder %s10, 1
    %p49 = scmp.ne.s32.totalorder %s44, %s46
    %p50 = scmp.eq.s32.totalorder %s10, 0
    %p51 = por %p49, %p50
    %p52 = scmp.ne.s32.totalorder %s44, %s46
    %p53 = scmp.eq.s32.totalorder %s15, 1
    %p54 = por %p52, %p53
    %p55 = scmp.ne.s32.totalorder %s46, %s47
    %p56 = scmp.eq.s32.totalorder %s15, 0
    %p57 = por %p55, %p56
    %p58 = scmp.ne.s32.totalorder %s46, %s47
    %p59 = scmp.eq.s32.totalorder %s16, 1
    %p60 = por %p58, %p59
    %p62 = scmp.ne.s32.totalorder %s47, %s61
    %p63 = scmp.eq.s32.totalorder %s16, 0
    %p64 = por %p62, %p63
    %s66 = sadd.s32 %s65, 1
    %p69 = scmp.eq.s32.totalorder %s10, 1
    %p70 = scmp.ne.s32.totalorder %s65, %s67
    %p71 = scmp.eq.s32.totalorder %s10, 0
    %p72 = por %p70, %p71
    %p73 = scmp.ne.s32.totalorder %s65, %s67
    %p74 = scmp.eq.s32.totalorder %s15, 1
    %p75 = por %p73, %p74
    %p76 = scmp.ne.s32.totalorder %s67, %s68
    %p77 = scmp.eq.s32.totalorder %s15, 0
    %p78 = por %p76, %p77
    %p79 = scmp.ne.s32.totalorder %s67, %s68
    %p80 = scmp.eq.s32.totalorder %s16, 1
    %p81 = por %p79, %p80
    %p83 = scmp.ne.s32.totalorder %s68, %s82
    %p84 = scmp.eq.s32.totalorder %s16, 0
    %p85 = por %p83, %p84
    %s87 = sadd.s32 %s86, 1
    %p90 = scmp.eq.s32.totalorder %s10, 1
    %p91 = scmp.ne.s32.totalorder %s86, %s88
    %p92 = scmp.eq.s32.totalorder %s10, 0
    %p93 = por %p91, %p92
    %p94 = scmp.ne.s32.totalorder %s86, %s88
    %p95 = scmp.eq.s32.totalorder %s15, 1
    %p96 = por %p94, %p95
    %p97 = scmp.ne.s32.totalorder %s88, %s89
    %p98 = scmp.eq.s32.totalorder %s15, 0
    %p99 = por %p97, %p98
    %p100 = scmp.ne.s32.totalorder %s88, %s89
    %p101 = scmp.eq.s32.totalorder %s16, 1
    %p102 = por %p100, %p101
    %p104 = scmp.ne.s32.totalorder %s89, %s103
    %p105 = scmp.eq.s32.totalorder %s16, 0
    %p106 = por %p104, %p105
    %s107 = ssub.s32 %s10, %s17
    %p108 = scmp.eq.s32.totalorder %s107, 0
    %s110 = sadd.s32 %s109, 1
    %s111 = scalar_select %p108, %s109, %s110
    %p114 = pneg %p108
    %p115 = scmp.eq.s32.totalorder %s10, 1
    %p116 = por %p114, %p115
    %p117 = scmp.ne.s32.totalorder %s109, %s112
    %p118 = scmp.eq.s32.totalorder %s10, 0
    %p119 = por %p117, %p118
    %p120 = scmp.ne.s32.totalorder %s109, %s112
    %p121 = scmp.eq.s32.totalorder %s15, 1
    %p122 = por %p120, %p121
    %p123 = scmp.ne.s32.totalorder %s112, %s113
    %p124 = scmp.eq.s32.totalorder %s15, 0
    %p125 = por %p123, %p124
    %p126 = scmp.ne.s32.totalorder %s112, %s113
    %p127 = scmp.eq.s32.totalorder %s16, 1
    %p128 = por %p126, %p127
    %p130 = scmp.ne.s32.totalorder %s113, %s129
    %p131 = scmp.eq.s32.totalorder %s16, 0
    %p132 = por %p130, %p131
    %p133 = scmp.le.s32.totalorder 1, %s10
    %p134 = scmp.lt.s32.totalorder %s10, 3
    %p135 = pnand %p133, %p134
    %p136 = pneg %p135
    // Predicated region
    $region9: #{spafe_forward.4} parent=5 // pred_check
      _
    $region10: #{spafe_forward.4} parent=5 // pred_check_branch
      %138 = sbr.rel (%p135) target = $region12
    $region11: #{spafe_forward.4} parent=5 // pred_region
      %s139 = ssub.s32 %s10, 1
      // Predicated region
      $region13: #{spafe_forward.4} parent=11 // pred_check
        %p140 = pneg %p57
      $region14: #{spafe_forward.4} parent=11 // pred_check_branch
        %142 = sbr.rel (%p140) target = $region16
      $region15: #{spafe_forward.4} parent=11 // pred_region
        _
      $region16: #{spafe_forward.4} parent=11 // pred_fallthru
        _
      // Predicated region
      $region17: #{spafe_forward.4} parent=11 // pred_check
        %p143 = pneg %p78
      $region18: #{spafe_forward.4} parent=11 // pred_check_branch
        %145 = sbr.rel (%p143) target = $region20
      $region19: #{spafe_forward.4} parent=11 // pred_region
        _
      $region20: #{spafe_forward.4} parent=11 // pred_fallthru
        _
      // Predicated region
      $region21: #{spafe_forward.4} parent=11 // pred_check
        %p146 = pneg %p99
      $region22: #{spafe_forward.4} parent=11 // pred_check_branch
        %148 = sbr.rel (%p146) target = $region24
      $region23: #{spafe_forward.4} parent=11 // pred_region
        _
      $region24: #{spafe_forward.4} parent=11 // pred_fallthru
        _
    $region12: #{spafe_forward.4} parent=5 // pred_fallthru
      _
    %p149 = scmp.lt.s32.totalorder %s10, 2
    // Predicated region
    $region25: #{spafe_forward.4} parent=5 // pred_check
      %p150 = pneg %p149
    $region26: #{spafe_forward.4} parent=5 // pred_check_branch
      %152 = sbr.rel (%p150) target = $region28
    $region27: #{spafe_forward.4} parent=5 // pred_region
      // Predicated region
      $region29: #{spafe_forward.4} parent=27 // pred_check
        %p153 = pneg %p30
      $region30: #{spafe_forward.4} parent=27 // pred_check_branch
        %155 = sbr.rel (%p153) target = $region32
      $region31: #{spafe_forward.4} parent=27 // pred_region
        %p156 = scmp.lt.s32.totalorder %s10, 1
        %s157 = scalar_select %p156, %s10, 1
        %s158 = smul.addr %s157, 8
        %s159 = smul.addr %s158, 4
        %s160 = scalar_lea.vmem %s0, %s159
      $region32: #{spafe_forward.4} parent=27 // pred_fallthru
        _
    $region28: #{spafe_forward.4} parent=5 // pred_fallthru
      _
    %p161 = scmp.le.s32.totalorder 1, %s10
    %p162 = scmp.lt.s32.totalorder %s10, 3
    %p163 = pnand %p161, %p162
    %p164 = pneg %p163
    // Predicated region
    $region33: #{spafe_forward.4} parent=5 // pred_check
      _
    $region34: #{spafe_forward.4} parent=5 // pred_check_branch
      %166 = sbr.rel (%p163) target = $region36
    $region35: #{spafe_forward.4} parent=5 // pred_region
      %s167 = ssub.s32 %s10, 1
      %p168 = scmp.lt.s32.totalorder %s15, 1
      %s169 = scalar_select %p168, %s15, 1
      %s170 = smul.addr %s169, 8
      %s171 = smul.addr %s170, 4
      %s172 = scalar_lea.vmem %s0, %s171
      %p173 = pneg %p36
      %p174 = pneg %p33
      %p175 = pneg %p57
      %p176 = pneg %p54
      %p177 = pneg %p78
      %p178 = pneg %p75
      %p179 = pneg %p99
      %p180 = pneg %p96
      %p181 = pneg %p125
      %p182 = pneg %p122
      %p183 = scmp.lt.s32.totalorder %s15, 1
      %s184 = scalar_select %p183, %s15, 1
      %s185 = smul.addr %s184, 16
      %s186 = smul.addr %s185, 8
      %s187 = scalar_lea.vmem %s4, %s186
      %p188 = scmp.lt.s32.totalorder %s15, 1
      %s189 = scalar_select %p188, %s15, 1
      %s190 = smul.addr %s189, 8
      %s191 = smul.addr %s190, 4
      %s192 = scalar_lea.vmem %s0, %s191
      %p193 = scmp.lt.s32.totalorder %s15, 1
      %s194 = scalar_select %p193, %s15, 1
      %s195 = smul.addr %s194, 16
      %s196 = smul.addr %s195, 8
      %s197 = scalar_lea.vmem %s4, %s196
      %v199 = vld [vmem:[%s1] sm:$0xf]
      %v200 = vld [vmem:[%s1 + $0x4] sm:$0xf]
      %v201 = vld [vmem:[%s1 + $0x8] sm:$0xf]
      %v202 = vld [vmem:[%s1 + $0xc] sm:$0xf]
      %v203 = vld [vmem:[%s1 + $0x10] sm:$0xf]
      %v204 = vld [vmem:[%s1 + $0x14] sm:$0xf]
      %v205 = vld [vmem:[%s1 + $0x18] sm:$0xf]
      %v206 = vld [vmem:[%s1 + $0x1c] sm:$0xf]
      %v207 = vld [vmem:[%s1 + $0x20] sm:$0xf]
      %v208 = vld [vmem:[%s1 + $0x24] sm:$0xf]
      %v209 = vld [vmem:[%s1 + $0x28] sm:$0xf]
      %v210 = vld [vmem:[%s1 + $0x2c] sm:$0xf]
      %v211 = vld [vmem:[%s1 + $0x30] sm:$0xf]
      %v212 = vld [vmem:[%s1 + $0x34] sm:$0xf]
      %v213 = vld [vmem:[%s1 + $0x38] sm:$0xf]
      %v214 = vld [vmem:[%s1 + $0x3c] sm:$0xf]
      %v215 = vld [vmem:[%s192] sm:$0xff]
      %v216 = vld [vmem:[%s192 + $0x8] sm:$0xff]
      %v217 = vld [vmem:[%s192 + $0x10] sm:$0xff]
      %v218 = vld [vmem:[%s192 + $0x18] sm:$0xff]
      %v235 = vunpack.c.l.b16 %v199
      %v236 = vunpack.c.l.b16 %v200
      %v237 = vunpack.c.l.b16 %v201
      %v238 = vunpack.c.l.b16 %v202
      %v239 = vunpack.c.l.b16 %v203
      %v240 = vunpack.c.l.b16 %v204
      %v241 = vunpack.c.l.b16 %v205
      %v242 = vunpack.c.l.b16 %v206
      %v243 = vunpack.c.l.b16 %v207
      %v244 = vunpack.c.l.b16 %v208
      %v245 = vunpack.c.l.b16 %v209
      %v246 = vunpack.c.l.b16 %v210
      %v247 = vunpack.c.l.b16 %v211
      %v248 = vunpack.c.l.b16 %v212
      %v249 = vunpack.c.l.b16 %v213
      %v250 = vunpack.c.l.b16 %v214
      %v251 = vpack.c.b16 %v236, %v235
      %v252 = vpack.c.b16 %v238, %v237
      %v253 = vpack.c.b16 %v240, %v239
      %v254 = vpack.c.b16 %v242, %v241
      %v255 = vpack.c.b16 %v244, %v243
      %v256 = vpack.c.b16 %v246, %v245
      %v257 = vpack.c.b16 %v248, %v247
      %v258 = vpack.c.b16 %v250, %v249
      %v263 = vunpack.c.l.b16 %v215
      %v264 = vunpack.c.h.b16 %v215
      %v265 = vunpack.c.l.b16 %v216
      %v266 = vunpack.c.h.b16 %v216
      %v267 = vunpack.c.l.b16 %v217
      %v268 = vunpack.c.h.b16 %v217
      %v269 = vunpack.c.l.b16 %v218
      %v270 = vunpack.c.h.b16 %v218
      %v271 = vpack.c.b16 %v265, %v263
      %v272 = vpack.c.b16 %v266, %v264
      %v273 = vpack.c.b16 %v269, %v267
      %v274 = vpack.c.b16 %v270, %v268
      %vm279 = vcmask 261120
      %v281 = vsel %vm279, %v251, 0
      %v284 = vsel %vm279, %v252, 0
      %v287 = vsel %vm279, %v253, 0
      %v290 = vsel %vm279, %v254, 0
      %v293 = vsel %vm279, %v255, 0
      %v296 = vsel %vm279, %v256, 0
      %v299 = vsel %vm279, %v257, 0
      %v302 = vsel %vm279, %v258, 0
      %304 = vmatprep.subr.bf16.mxu0 %v272
      %305 = vmatpush1.bf16.msra.mxu0 %v271
      %306 = vmatprep.subr.bf16.mxu0 %v274
      %307 = vmatpush1.bf16.msra.mxu0 %v273
      %308 = vmatprep.subr.bf16.mxu0 0
      %309 = vmatpush1.bf16.msra.mxu0 0
      %310 = vmatprep.subr.bf16.mxu0 0
      %311 = vmatpush1.bf16.msra.mxu0 0
      %312 = vmatprep.subr.bf16.mxu0 0
      %313 = vmatpush1.bf16.msra.mxu0 0
      %314 = vmatprep.subr.bf16.mxu0 0
      %315 = vmatpush1.bf16.msra.mxu0 0
      %316 = vmatprep.subr.bf16.mxu0 0
      %317 = vmatpush1.bf16.msra.mxu0 0
      %318 = vmatprep.subr.bf16.mxu0 0
      %319 = vmatpush1.bf16.msra.mxu0 0
      %320 = vmatprep.subr.bf16.mxu0 0
      %321 = vmatpush1.bf16.msra.mxu0 0
      %322 = vmatprep.subr.bf16.mxu0 0
      %323 = vmatpush1.bf16.msra.mxu0 0
      %324 = vmatprep.subr.bf16.mxu0 0
      %325 = vmatpush1.bf16.msra.mxu0 0
      %326 = vmatprep.subr.bf16.mxu0 0
      %327 = vmatpush1.bf16.msra.mxu0 0
      %328 = vmatprep.subr.bf16.mxu0 0
      %329 = vmatpush1.bf16.msra.mxu0 0
      %330 = vmatprep.subr.bf16.mxu0 0
      %331 = vmatpush1.bf16.msra.mxu0 0
      %332 = vmatprep.subr.bf16.mxu0 0
      %333 = vmatpush1.bf16.msra.mxu0 0
      %334 = vmatprep.subr.bf16.mxu0 0
      %335 = vmatpush1.bf16.msra.mxu0 0
      %336 = vmatprep.mubr.bf16.mxu0 0
      %337 = vmatmul.mubr.bf16.gmra.mrb[0].mxu0 %v281
      %v338 = vpop.f32.mrb[0].mxu0
      %v339 = vadd.f32 0.0, %v338
      %v340 = vpop.f32.mrb[0].mxu0
      %v341 = vadd.f32 0.0, %v340
      %v342 = vpop.f32.mrb[0].mxu0
      %v343 = vadd.f32 0.0, %v342
      %v344 = vpop.f32.mrb[0].mxu0
      %v345 = vadd.f32 0.0, %v344
      %346 = vmatprep.mubr.bf16.mxu0 0
      %347 = vmatmul.mubr.bf16.gmra.mrb[0].mxu0 %v284
      %v348 = vpop.f32.mrb[0].mxu0
      %v349 = vadd.f32 0.0, %v348
      %v350 = vpop.f32.mrb[0].mxu0
      %v351 = vadd.f32 0.0, %v350
      %v352 = vpop.f32.mrb[0].mxu0
      %v353 = vadd.f32 0.0, %v352
      %v354 = vpop.f32.mrb[0].mxu0
      %v355 = vadd.f32 0.0, %v354
      %356 = vmatprep.mubr.bf16.mxu0 0
      %357 = vmatmul.mubr.bf16.gmra.mrb[0].mxu0 %v287
      %v358 = vpop.f32.mrb[0].mxu0
      %v359 = vadd.f32 0.0, %v358
      %v360 = vpop.f32.mrb[0].mxu0
      %v361 = vadd.f32 0.0, %v360
      %v362 = vpop.f32.mrb[0].mxu0
      %v363 = vadd.f32 0.0, %v362
      %v364 = vpop.f32.mrb[0].mxu0
      %v365 = vadd.f32 0.0, %v364
      %366 = vmatprep.mubr.bf16.mxu0 0
      %367 = vmatmul.mubr.bf16.gmra.mrb[0].mxu0 %v290
      %v368 = vpop.f32.mrb[0].mxu0
      %v369 = vadd.f32 0.0, %v368
      %v370 = vpop.f32.mrb[0].mxu0
      %v371 = vadd.f32 0.0, %v370
      %v372 = vpop.f32.mrb[0].mxu0
      %v373 = vadd.f32 0.0, %v372
      %v374 = vpop.f32.mrb[0].mxu0
      %v375 = vadd.f32 0.0, %v374
      %376 = vmatprep.mubr.bf16.mxu0 0
      %377 = vmatmul.mubr.bf16.gmra.mrb[0].mxu0 %v293
      %v378 = vpop.f32.mrb[0].mxu0
      %v379 = vadd.f32 0.0, %v378
      %v380 = vpop.f32.mrb[0].mxu0
      %v381 = vadd.f32 0.0, %v380
      %v382 = vpop.f32.mrb[0].mxu0
      %v383 = vadd.f32 0.0, %v382
      %v384 = vpop.f32.mrb[0].mxu0
      %v385 = vadd.f32 0.0, %v384
      %386 = vmatprep.mubr.bf16.mxu0 0
      %387 = vmatmul.mubr.bf16.gmra.mrb[0].mxu0 %v296
      %v388 = vpop.f32.mrb[0].mxu0
      %v389 = vadd.f32 0.0, %v388
      %v390 = vpop.f32.mrb[0].mxu0
      %v391 = vadd.f32 0.0, %v390
      %v392 = vpop.f32.mrb[0].mxu0
      %v393 = vadd.f32 0.0, %v392
      %v394 = vpop.f32.mrb[0].mxu0
      %v395 = vadd.f32 0.0, %v394
      %396 = vmatprep.mubr.bf16.mxu0 0
      %397 = vmatmul.mubr.bf16.gmra.mrb[0].mxu0 %v299
      %v398 = vpop.f32.mrb[0].mxu0
      %v399 = vadd.f32 0.0, %v398
      %v400 = vpop.f32.mrb[0].mxu0
      %v401 = vadd.f32 0.0, %v400
      %v402 = vpop.f32.mrb[0].mxu0
      %v403 = vadd.f32 0.0, %v402
      %v404 = vpop.f32.mrb[0].mxu0
      %v405 = vadd.f32 0.0, %v404
      %406 = vmatprep.mubr.bf16.mxu0 0
      %407 = vmatmul.mubr.bf16.gmra.mrb[0].mxu0 %v302
      %v408 = vpop.f32.mrb[0].mxu0
      %v409 = vadd.f32 0.0, %v408
      %v410 = vpop.f32.mrb[0].mxu0
      %v411 = vadd.f32 0.0, %v410
      %v412 = vpop.f32.mrb[0].mxu0
      %v413 = vadd.f32 0.0, %v412
      %v414 = vpop.f32.mrb[0].mxu0
      %v415 = vadd.f32 0.0, %v414
      %416 = vdwg.mxu0
      %v417 = vld [vmem:[%s2] sm:$0xff]
      %v418 = vld [vmem:[%s2 + $0x8] sm:$0xff]
      %v419 = vld [vmem:[%s2 + $0x10] sm:$0xff]
      %v420 = vld [vmem:[%s2 + $0x18] sm:$0xff]
      %v421 = vld [vmem:[%s2 + $0x20] sm:$0xff]
      %v422 = vld [vmem:[%s2 + $0x28] sm:$0xff]
      %v423 = vld [vmem:[%s2 + $0x30] sm:$0xff]
      %v424 = vld [vmem:[%s2 + $0x38] sm:$0xff]
      %v425 = vld [vmem:[%s2 + $0x40] sm:$0xff]
      %v426 = vld [vmem:[%s2 + $0x48] sm:$0xff]
      %v427 = vld [vmem:[%s2 + $0x50] sm:$0xff]
      %v428 = vld [vmem:[%s2 + $0x58] sm:$0xff]
      %v429 = vld [vmem:[%s2 + $0x60] sm:$0xff]
      %v430 = vld [vmem:[%s2 + $0x68] sm:$0xff]
      %v431 = vld [vmem:[%s2 + $0x70] sm:$0xff]
      %v432 = vld [vmem:[%s2 + $0x78] sm:$0xff]
      %434 = vset.pattern.permute.xlu0 0
      %435 = vperm.xlu0 %434, %v417
      %v436 = vpop.permute.xlu0 %435
      %439 = vset.pattern.permute.xlu0 0
      %440 = vperm.xlu0 %439, %v418
      %v441 = vpop.permute.xlu0 %440
      %444 = vset.pattern.permute.xlu0 0
      %445 = vperm.xlu0 %444, %v419
      %v446 = vpop.permute.xlu0 %445
      %449 = vset.pattern.permute.xlu0 0
      %450 = vperm.xlu0 %449, %v420
      %v451 = vpop.permute.xlu0 %450
      %454 = vset.pattern.permute.xlu0 0
      %455 = vperm.xlu0 %454, %v421
      %v456 = vpop.permute.xlu0 %455
      %459 = vset.pattern.permute.xlu0 0
      %460 = vperm.xlu0 %459, %v422
      %v461 = vpop.permute.xlu0 %460
      %464 = vset.pattern.permute.xlu0 0
      %465 = vperm.xlu0 %464, %v423
      %v466 = vpop.permute.xlu0 %465
      %469 = vset.pattern.permute.xlu0 0
      %470 = vperm.xlu0 %469, %v424
      %v471 = vpop.permute.xlu0 %470
      %474 = vset.pattern.permute.xlu0 0
      %475 = vperm.xlu0 %474, %v425
      %v476 = vpop.permute.xlu0 %475
      %479 = vset.pattern.permute.xlu0 0
      %480 = vperm.xlu0 %479, %v426
      %v481 = vpop.permute.xlu0 %480
      %484 = vset.pattern.permute.xlu0 0
      %485 = vperm.xlu0 %484, %v427
      %v486 = vpop.permute.xlu0 %485
      %489 = vset.pattern.permute.xlu0 0
      %490 = vperm.xlu0 %489, %v428
      %v491 = vpop.permute.xlu0 %490
      %494 = vset.pattern.permute.xlu0 0
      %495 = vperm.xlu0 %494, %v429
      %v496 = vpop.permute.xlu0 %495
      %499 = vset.pattern.permute.xlu0 0
      %500 = vperm.xlu0 %499, %v430
      %v501 = vpop.permute.xlu0 %500
      %504 = vset.pattern.permute.xlu0 0
      %505 = vperm.xlu0 %504, %v431
      %v506 = vpop.permute.xlu0 %505
      %509 = vset.pattern.permute.xlu0 0
      %510 = vperm.xlu0 %509, %v432
      %v511 = vpop.permute.xlu0 %510
      %v513 = vmul.f32 %v339, %v436
      %v514 = vmul.f32 %v341, %v436
      %v515 = vmul.f32 %v343, %v441
      %v516 = vmul.f32 %v345, %v441
      %v517 = vmul.f32 %v349, %v446
      %v518 = vmul.f32 %v351, %v446
      %v519 = vmul.f32 %v353, %v451
      %v520 = vmul.f32 %v355, %v451
      %v521 = vmul.f32 %v359, %v456
      %v522 = vmul.f32 %v361, %v456
      %v523 = vmul.f32 %v363, %v461
      %v524 = vmul.f32 %v365, %v461
      %v525 = vmul.f32 %v369, %v466
      %v526 = vmul.f32 %v371, %v466
      %v527 = vmul.f32 %v373, %v471
      %v528 = vmul.f32 %v375, %v471
      %v529 = vmul.f32 %v379, %v476
      %v530 = vmul.f32 %v381, %v476
      %v531 = vmul.f32 %v383, %v481
      %v532 = vmul.f32 %v385, %v481
      %v533 = vmul.f32 %v389, %v486
      %v534 = vmul.f32 %v391, %v486
      %v535 = vmul.f32 %v393, %v491
      %v536 = vmul.f32 %v395, %v491
      %v537 = vmul.f32 %v399, %v496
      %v538 = vmul.f32 %v401, %v496
      %v539 = vmul.f32 %v403, %v501
      %v540 = vmul.f32 %v405, %v501
      %v541 = vmul.f32 %v409, %v506
      %v542 = vmul.f32 %v411, %v506
      %v543 = vmul.f32 %v413, %v511
      %v544 = vmul.f32 %v415, %v511
      %v545 = vld [vmem:[%s3] sm:$0xff]
      %v546 = vld [vmem:[%s3 + $0x8] sm:$0xff]
      %v547 = vld [vmem:[%s3 + $0x10] sm:$0xff]
      %v548 = vld [vmem:[%s3 + $0x18] sm:$0xff]
      %v549 = vld [vmem:[%s3 + $0x20] sm:$0xff]
      %v550 = vld [vmem:[%s3 + $0x28] sm:$0xff]
      %v551 = vld [vmem:[%s3 + $0x30] sm:$0xff]
      %v552 = vld [vmem:[%s3 + $0x38] sm:$0xff]
      %v553 = vld [vmem:[%s3 + $0x40] sm:$0xff]
      %v554 = vld [vmem:[%s3 + $0x48] sm:$0xff]
      %v555 = vld [vmem:[%s3 + $0x50] sm:$0xff]
      %v556 = vld [vmem:[%s3 + $0x58] sm:$0xff]
      %v557 = vld [vmem:[%s3 + $0x60] sm:$0xff]
      %v558 = vld [vmem:[%s3 + $0x68] sm:$0xff]
      %v559 = vld [vmem:[%s3 + $0x70] sm:$0xff]
      %v560 = vld [vmem:[%s3 + $0x78] sm:$0xff]
      %562 = vset.pattern.permute.xlu0 0
      %563 = vperm.xlu0 %562, %v545
      %v564 = vpop.permute.xlu0 %563
      %567 = vset.pattern.permute.xlu0 0
      %568 = vperm.xlu0 %567, %v546
      %v569 = vpop.permute.xlu0 %568
      %572 = vset.pattern.permute.xlu0 0
      %573 = vperm.xlu0 %572, %v547
      %v574 = vpop.permute.xlu0 %573
      %577 = vset.pattern.permute.xlu0 0
      %578 = vperm.xlu0 %577, %v548
      %v579 = vpop.permute.xlu0 %578
      %582 = vset.pattern.permute.xlu0 0
      %583 = vperm.xlu0 %582, %v549
      %v584 = vpop.permute.xlu0 %583
      %587 = vset.pattern.permute.xlu0 0
      %588 = vperm.xlu0 %587, %v550
      %v589 = vpop.permute.xlu0 %588
      %592 = vset.pattern.permute.xlu0 0
      %593 = vperm.xlu0 %592, %v551
      %v594 = vpop.permute.xlu0 %593
      %597 = vset.pattern.permute.xlu0 0
      %598 = vperm.xlu0 %597, %v552
      %v599 = vpop.permute.xlu0 %598
      %602 = vset.pattern.permute.xlu0 0
      %603 = vperm.xlu0 %602, %v553
      %v604 = vpop.permute.xlu0 %603
      %607 = vset.pattern.permute.xlu0 0
      %608 = vperm.xlu0 %607, %v554
      %v609 = vpop.permute.xlu0 %608
      %612 = vset.pattern.permute.xlu0 0
      %613 = vperm.xlu0 %612, %v555
      %v614 = vpop.permute.xlu0 %613
      %617 = vset.pattern.permute.xlu0 0
      %618 = vperm.xlu0 %617, %v556
      %v619 = vpop.permute.xlu0 %618
      %622 = vset.pattern.permute.xlu0 0
      %623 = vperm.xlu0 %622, %v557
      %v624 = vpop.permute.xlu0 %623
      %627 = vset.pattern.permute.xlu0 0
      %628 = vperm.xlu0 %627, %v558
      %v629 = vpop.permute.xlu0 %628
      %632 = vset.pattern.permute.xlu0 0
      %633 = vperm.xlu0 %632, %v559
      %v634 = vpop.permute.xlu0 %633
      %637 = vset.pattern.permute.xlu0 0
      %638 = vperm.xlu0 %637, %v560
      %v639 = vpop.permute.xlu0 %638
      %v641 = vadd.f32 %v513, %v564
      %v642 = vadd.f32 %v514, %v564
      %v643 = vadd.f32 %v515, %v569
      %v644 = vadd.f32 %v516, %v569
      %v645 = vadd.f32 %v517, %v574
      %v646 = vadd.f32 %v518, %v574
      %v647 = vadd.f32 %v519, %v579
      %v648 = vadd.f32 %v520, %v579
      %v649 = vadd.f32 %v521, %v584
      %v650 = vadd.f32 %v522, %v584
      %v651 = vadd.f32 %v523, %v589
      %v652 = vadd.f32 %v524, %v589
      %v653 = vadd.f32 %v525, %v594
      %v654 = vadd.f32 %v526, %v594
      %v655 = vadd.f32 %v527, %v599
      %v656 = vadd.f32 %v528, %v599
      %v657 = vadd.f32 %v529, %v604
      %v658 = vadd.f32 %v530, %v604
      %v659 = vadd.f32 %v531, %v609
      %v660 = vadd.f32 %v532, %v609
      %v661 = vadd.f32 %v533, %v614
      %v662 = vadd.f32 %v534, %v614
      %v663 = vadd.f32 %v535, %v619
      %v664 = vadd.f32 %v536, %v619
      %v665 = vadd.f32 %v537, %v624
      %v666 = vadd.f32 %v538, %v624
      %v667 = vadd.f32 %v539, %v629
      %v668 = vadd.f32 %v540, %v629
      %v669 = vadd.f32 %v541, %v634
      %v670 = vadd.f32 %v542, %v634
      %v671 = vadd.f32 %v543, %v639
      %v672 = vadd.f32 %v544, %v639
      %v673 = vmax.f32 %v641, 0.0
      %v674 = vmax.f32 %v642, 0.0
      %v675 = vmax.f32 %v643, 0.0
      %v676 = vmax.f32 %v644, 0.0
      %v677 = vmax.f32 %v645, 0.0
      %v678 = vmax.f32 %v646, 0.0
      %v679 = vmax.f32 %v647, 0.0
      %v680 = vmax.f32 %v648, 0.0
      %v681 = vmax.f32 %v649, 0.0
      %v682 = vmax.f32 %v650, 0.0
      %v683 = vmax.f32 %v651, 0.0
      %v684 = vmax.f32 %v652, 0.0
      %v685 = vmax.f32 %v653, 0.0
      %v686 = vmax.f32 %v654, 0.0
      %v687 = vmax.f32 %v655, 0.0
      %v688 = vmax.f32 %v656, 0.0
      %v689 = vmax.f32 %v657, 0.0
      %v690 = vmax.f32 %v658, 0.0
      %v691 = vmax.f32 %v659, 0.0
      %v692 = vmax.f32 %v660, 0.0
      %v693 = vmax.f32 %v661, 0.0
      %v694 = vmax.f32 %v662, 0.0
      %v695 = vmax.f32 %v663, 0.0
      %v696 = vmax.f32 %v664, 0.0
      %v697 = vmax.f32 %v665, 0.0
      %v698 = vmax.f32 %v666, 0.0
      %v699 = vmax.f32 %v667, 0.0
      %v700 = vmax.f32 %v668, 0.0
      %v701 = vmax.f32 %v669, 0.0
      %v702 = vmax.f32 %v670, 0.0
      %v703 = vmax.f32 %v671, 0.0
      %v704 = vmax.f32 %v672, 0.0
      %721 = vrot.lane.b32.xlu0 %v673, 64
      %v722 = vpop.permute.xlu0 %721
      %723 = vrot.lane.b32.xlu0 %v675, 64
      %v724 = vpop.permute.xlu0 %723
      %725 = vrot.lane.b32.xlu0 %v677, 64
      %v726 = vpop.permute.xlu0 %725
      %727 = vrot.lane.b32.xlu0 %v679, 64
      %v728 = vpop.permute.xlu0 %727
      %729 = vrot.lane.b32.xlu0 %v681, 64
      %v730 = vpop.permute.xlu0 %729
      %731 = vrot.lane.b32.xlu0 %v683, 64
      %v732 = vpop.permute.xlu0 %731
      %733 = vrot.lane.b32.xlu0 %v685, 64
      %v734 = vpop.permute.xlu0 %733
      %735 = vrot.lane.b32.xlu0 %v687, 64
      %v736 = vpop.permute.xlu0 %735
      %737 = vrot.lane.b32.xlu0 %v689, 64
      %v738 = vpop.permute.xlu0 %737
      %739 = vrot.lane.b32.xlu0 %v691, 64
      %v740 = vpop.permute.xlu0 %739
      %741 = vrot.lane.b32.xlu0 %v693, 64
      %v742 = vpop.permute.xlu0 %741
      %743 = vrot.lane.b32.xlu0 %v695, 64
      %v744 = vpop.permute.xlu0 %743
      %745 = vrot.lane.b32.xlu0 %v697, 64
      %v746 = vpop.permute.xlu0 %745
      %747 = vrot.lane.b32.xlu0 %v699, 64
      %v748 = vpop.permute.xlu0 %747
      %749 = vrot.lane.b32.xlu0 %v701, 64
      %v750 = vpop.permute.xlu0 %749
      %751 = vrot.lane.b32.xlu0 %v703, 64
      %v752 = vpop.permute.xlu0 %751
      %v769 = vmax.f32 %v673, %v722
      %v770 = vmax.f32 %v675, %v724
      %v771 = vmax.f32 %v677, %v726
      %v772 = vmax.f32 %v679, %v728
      %v773 = vmax.f32 %v681, %v730
      %v774 = vmax.f32 %v683, %v732
      %v775 = vmax.f32 %v685, %v734
      %v776 = vmax.f32 %v687, %v736
      %v777 = vmax.f32 %v689, %v738
      %v778 = vmax.f32 %v691, %v740
      %v779 = vmax.f32 %v693, %v742
      %v780 = vmax.f32 %v695, %v744
      %v781 = vmax.f32 %v697, %v746
      %v782 = vmax.f32 %v699, %v748
      %v783 = vmax.f32 %v701, %v750
      %v784 = vmax.f32 %v703, %v752
      %801 = vrot.lane.b32.xlu0 %v674, 64
      %v802 = vpop.permute.xlu0 %801
      %803 = vrot.lane.b32.xlu0 %v676, 64
      %v804 = vpop.permute.xlu0 %803
      %805 = vrot.lane.b32.xlu0 %v678, 64
      %v806 = vpop.permute.xlu0 %805
      %807 = vrot.lane.b32.xlu0 %v680, 64
      %v808 = vpop.permute.xlu0 %807
      %809 = vrot.lane.b32.xlu0 %v682, 64
      %v810 = vpop.permute.xlu0 %809
      %811 = vrot.lane.b32.xlu0 %v684, 64
      %v812 = vpop.permute.xlu0 %811
      %813 = vrot.lane.b32.xlu0 %v686, 64
      %v814 = vpop.permute.xlu0 %813
      %815 = vrot.lane.b32.xlu0 %v688, 64
      %v816 = vpop.permute.xlu0 %815
      %817 = vrot.lane.b32.xlu0 %v690, 64
      %v818 = vpop.permute.xlu0 %817
      %819 = vrot.lane.b32.xlu0 %v692, 64
      %v820 = vpop.permute.xlu0 %819
      %821 = vrot.lane.b32.xlu0 %v694, 64
      %v822 = vpop.permute.xlu0 %821
      %823 = vrot.lane.b32.xlu0 %v696, 64
      %v824 = vpop.permute.xlu0 %823
      %825 = vrot.lane.b32.xlu0 %v698, 64
      %v826 = vpop.permute.xlu0 %825
      %827 = vrot.lane.b32.xlu0 %v700, 64
      %v828 = vpop.permute.xlu0 %827
      %829 = vrot.lane.b32.xlu0 %v702, 64
      %v830 = vpop.permute.xlu0 %829
      %831 = vrot.lane.b32.xlu0 %v704, 64
      %v832 = vpop.permute.xlu0 %831
      %v849 = vmax.f32 %v674, %v802
      %v850 = vmax.f32 %v676, %v804
      %v851 = vmax.f32 %v678, %v806
      %v852 = vmax.f32 %v680, %v808
      %v853 = vmax.f32 %v682, %v810
      %v854 = vmax.f32 %v684, %v812
      %v855 = vmax.f32 %v686, %v814
      %v856 = vmax.f32 %v688, %v816
      %v857 = vmax.f32 %v690, %v818
      %v858 = vmax.f32 %v692, %v820
      %v859 = vmax.f32 %v694, %v822
      %v860 = vmax.f32 %v696, %v824
      %v861 = vmax.f32 %v698, %v826
      %v862 = vmax.f32 %v700, %v828
      %v863 = vmax.f32 %v702, %v830
      %v864 = vmax.f32 %v704, %v832
      %v865 = vmax.f32 %v769, %v849
      %v866 = vmax.f32 %v770, %v850
      %v867 = vmax.f32 %v771, %v851
      %v868 = vmax.f32 %v772, %v852
      %v869 = vmax.f32 %v773, %v853
      %v870 = vmax.f32 %v774, %v854
      %v871 = vmax.f32 %v775, %v855
      %v872 = vmax.f32 %v776, %v856
      %v873 = vmax.f32 %v777, %v857
      %v874 = vmax.f32 %v778, %v858
      %v875 = vmax.f32 %v779, %v859
      %v876 = vmax.f32 %v780, %v860
      %v877 = vmax.f32 %v781, %v861
      %v878 = vmax.f32 %v782, %v862
      %v879 = vmax.f32 %v783, %v863
      %v880 = vmax.f32 %v784, %v864
      %vm881 = vcmask 523264
      %882 = vst.msk [vmem:[%s197] sm:$0xff] %vm881, %v865
      %883 = vst.msk [vmem:[%s197 + $0x8] sm:$0xff] %vm881, %v866
      %884 = vst.msk [vmem:[%s197 + $0x10] sm:$0xff] %vm881, %v867
      %885 = vst.msk [vmem:[%s197 + $0x18] sm:$0xff] %vm881, %v868
      %886 = vst.msk [vmem:[%s197 + $0x20] sm:$0xff] %vm881, %v869
      %887 = vst.msk [vmem:[%s197 + $0x28] sm:$0xff] %vm881, %v870
      %888 = vst.msk [vmem:[%s197 + $0x30] sm:$0xff] %vm881, %v871
      %889 = vst.msk [vmem:[%s197 + $0x38] sm:$0xff] %vm881, %v872
      %890 = vst.msk [vmem:[%s197 + $0x40] sm:$0xff] %vm881, %v873
      %891 = vst.msk [vmem:[%s197 + $0x48] sm:$0xff] %vm881, %v874
      %892 = vst.msk [vmem:[%s197 + $0x50] sm:$0xff] %vm881, %v875
      %893 = vst.msk [vmem:[%s197 + $0x58] sm:$0xff] %vm881, %v876
      %894 = vst.msk [vmem:[%s197 + $0x60] sm:$0xff] %vm881, %v877
      %895 = vst.msk [vmem:[%s197 + $0x68] sm:$0xff] %vm881, %v878
      %896 = vst.msk [vmem:[%s197 + $0x70] sm:$0xff] %vm881, %v879
      %897 = vst.msk [vmem:[%s197 + $0x78] sm:$0xff] %vm881, %v880
      %p898 = scmp.lt.s32.totalorder %s15, 1
      %s899 = scalar_select %p898, %s15, 1
      %s900 = smul.addr %s899, 16
      %s901 = smul.addr %s900, 8
      %s902 = scalar_lea.vmem %s4, %s901
      // Predicated region
      $region37: #{spafe_forward.4} parent=35 // pred_check
        %p903 = pneg %p122
      $region38: #{spafe_forward.4} parent=35 // pred_check_branch
        %905 = sbr.rel (%p903) target = $region40
      $region39: #{spafe_forward.4} parent=35 // pred_region
        _
      $region40: #{spafe_forward.4} parent=35 // pred_fallthru
        _
    $region36: #{spafe_forward.4} parent=5 // pred_fallthru
      _
    %p906 = scmp.le.s32.totalorder 2, %s10
    // Predicated region
    $region41: #{spafe_forward.4} parent=5 // pred_check
      %p907 = pneg %p906
    $region42: #{spafe_forward.4} parent=5 // pred_check_branch
      %909 = sbr.rel (%p907) target = $region44
    $region43: #{spafe_forward.4} parent=5 // pred_region
      %s910 = ssub.s32 %s10, 2
      // Predicated region
      $region45: #{spafe_forward.4} parent=43 // pred_check
        %p911 = pneg %p128
      $region46: #{spafe_forward.4} parent=43 // pred_check_branch
        %913 = sbr.rel (%p911) target = $region48
      $region47: #{spafe_forward.4} parent=43 // pred_region
        %p914 = scmp.lt.s32.totalorder %s16, 1
        %s915 = scalar_select %p914, %s16, 1
        %s916 = smul.addr %s915, 16
        %s917 = smul.addr %s916, 8
        %s918 = scalar_lea.vmem %s4, %s917
      $region48: #{spafe_forward.4} parent=43 // pred_fallthru
        _
    $region44: #{spafe_forward.4} parent=5 // pred_fallthru
      _
  $region6: #{spafe_forward.4} parent=0 // loop_footer
    %s14 = sadd.s32 1, %s10
  $region7: #{spafe_forward.4} parent=0 // loop_footer_branch
    %9 = sbr.rel target = $region3
  $region8: #{spafe_forward.4} parent=0 // loop_exit
    _

// kernel: spafe_forward.5
$region0: #{spafe_forward.5}
  #allocation0 [shape = 'u32[]', space=smem, size = 0x4, offset = 0x4, fixed_abs, tag = 'smem constant byte address 0x4 - core index']
  #allocation1 [shape = 'u32[144,128]{1,0:T(1,128)}', space=vmem, size = 0x12000, scoped, tag = 'internal scratch']
  %s0 = inlined_call_operand.vmem [shape: bf16[2,560,64], index: 0, kind: input, shape index: {}]
  %s1 = inlined_call_operand.vmem [shape: bf16[128,560], index: 1, kind: input, shape index: {}]
  %s2 = inlined_call_operand.vmem [shape: f32[128,1], index: 2, kind: input, shape index: {}]
  %s3 = inlined_call_operand.vmem [shape: f32[128,1], index: 3, kind: input, shape index: {}]
  %s4 = inlined_call_operand.vmem [shape: f32[2,128,16], index: 4, kind: output, shape index: {}]
  %s5 = sld [smem:[#allocation0]]
  $region49: #{spafe_forward.5} parent=0
    _
  %s7 = ssub.s32 1, %s5
  %s8 = scalar_select 0, %s7, %s5
  loop: start=0, step=1, limit=4
  $region2: #{spafe_forward.5} parent=0 // loop_pre_header
    _
  $region3: #{spafe_forward.5} parent=0 // loop_header
    %s10 = sphi 0, %s14
    %p11 = scmp.ge.s32.totalorder %s10, 4
    %s20 = sphi 0, %s22
    %s23 = sphi 0, %s20
    %s24 = sphi 0, %s23
    %s40 = sphi 0, %s24
    %s44 = sphi 0, %s44
    %s46 = sphi 0, %s44
    %s47 = sphi 0, %s46
    %s61 = sphi 0, %s47
    %s65 = sphi 0, %s65
    %s67 = sphi 0, %s65
    %s68 = sphi 0, %s67
    %s82 = sphi 0, %s68
    %s86 = sphi 0, %s86
    %s88 = sphi 0, %s86
    %s89 = sphi 0, %s88
    %s103 = sphi 0, %s89
    %s109 = sphi 0, %s111
    %s112 = sphi 0, %s109
    %s113 = sphi 0, %s112
    %s129 = sphi 0, %s113
  $region4: #{spafe_forward.5} parent=0 // loop_header_branch
    %13 = sbr.rel (%p11) target = $region8
  $region5: #{spafe_forward.5} parent=0 // loop_body
    %s15 = ssub.s32 %s10, 1
    %s16 = ssub.s32 %s10, 2
    %s17 = sadd.s32 %s10, 1
    %s18 = ssub.s32 %s10, %s17
    %p19 = scmp.eq.s32.totalorder %s18, 0
    %s21 = sadd.s32 %s20, 1
    %s22 = scalar_select %p19, %s20, %s21
    %p25 = pneg %p19
    %p26 = scmp.eq.s32.totalorder %s10, 1
    %p27 = por %p25, %p26
    %p28 = scmp.ne.s32.totalorder %s20, %s23
    %p29 = scmp.eq.s32.totalorder %s10, 0
    %p30 = por %p28, %p29
    %p31 = scmp.ne.s32.totalorder %s20, %s23
    %p32 = scmp.eq.s32.totalorder %s15, 1
    %p33 = por %p31, %p32
    %p34 = scmp.ne.s32.totalorder %s23, %s24
    %p35 = scmp.eq.s32.totalorder %s15, 0
    %p36 = por %p34, %p35
    %p37 = scmp.ne.s32.totalorder %s23, %s24
    %p38 = scmp.eq.s32.totalorder %s16, 1
    %p39 = por %p37, %p38
    %p41 = scmp.ne.s32.totalorder %s24, %s40
    %p42 = scmp.eq.s32.totalorder %s16, 0
    %p43 = por %p41, %p42
    %s45 = sadd.s32 %s44, 1
    %p48 = scmp.eq.s32.totalorder %s10, 1
    %p49 = scmp.ne.s32.totalorder %s44, %s46
    %p50 = scmp.eq.s32.totalorder %s10, 0
    %p51 = por %p49, %p50
    %p52 = scmp.ne.s32.totalorder %s44, %s46
    %p53 = scmp.eq.s32.totalorder %s15, 1
    %p54 = por %p52, %p53
    %p55 = scmp.ne.s32.totalorder %s46, %s47
    %p56 = scmp.eq.s32.totalorder %s15, 0
    %p57 = por %p55, %p56
    %p58 = scmp.ne.s32.totalorder %s46, %s47
    %p59 = scmp.eq.s32.totalorder %s16, 1
    %p60 = por %p58, %p59
    %p62 = scmp.ne.s32.totalorder %s47, %s61
    %p63 = scmp.eq.s32.totalorder %s16, 0
    %p64 = por %p62, %p63
    %s66 = sadd.s32 %s65, 1
    %p69 = scmp.eq.s32.totalorder %s10, 1
    %p70 = scmp.ne.s32.totalorder %s65, %s67
    %p71 = scmp.eq.s32.totalorder %s10, 0
    %p72 = por %p70, %p71
    %p73 = scmp.ne.s32.totalorder %s65, %s67
    %p74 = scmp.eq.s32.totalorder %s15, 1
    %p75 = por %p73, %p74
    %p76 = scmp.ne.s32.totalorder %s67, %s68
    %p77 = scmp.eq.s32.totalorder %s15, 0
    %p78 = por %p76, %p77
    %p79 = scmp.ne.s32.totalorder %s67, %s68
    %p80 = scmp.eq.s32.totalorder %s16, 1
    %p81 = por %p79, %p80
    %p83 = scmp.ne.s32.totalorder %s68, %s82
    %p84 = scmp.eq.s32.totalorder %s16, 0
    %p85 = por %p83, %p84
    %s87 = sadd.s32 %s86, 1
    %p90 = scmp.eq.s32.totalorder %s10, 1
    %p91 = scmp.ne.s32.totalorder %s86, %s88
    %p92 = scmp.eq.s32.totalorder %s10, 0
    %p93 = por %p91, %p92
    %p94 = scmp.ne.s32.totalorder %s86, %s88
    %p95 = scmp.eq.s32.totalorder %s15, 1
    %p96 = por %p94, %p95
    %p97 = scmp.ne.s32.totalorder %s88, %s89
    %p98 = scmp.eq.s32.totalorder %s15, 0
    %p99 = por %p97, %p98
    %p100 = scmp.ne.s32.totalorder %s88, %s89
    %p101 = scmp.eq.s32.totalorder %s16, 1
    %p102 = por %p100, %p101
    %p104 = scmp.ne.s32.totalorder %s89, %s103
    %p105 = scmp.eq.s32.totalorder %s16, 0
    %p106 = por %p104, %p105
    %s107 = ssub.s32 %s10, %s17
    %p108 = scmp.eq.s32.totalorder %s107, 0
    %s110 = sadd.s32 %s109, 1
    %s111 = scalar_select %p108, %s109, %s110
    %p114 = pneg %p108
    %p115 = scmp.eq.s32.totalorder %s10, 1
    %p116 = por %p114, %p115
    %p117 = scmp.ne.s32.totalorder %s109, %s112
    %p118 = scmp.eq.s32.totalorder %s10, 0
    %p119 = por %p117, %p118
    %p120 = scmp.ne.s32.totalorder %s109, %s112
    %p121 = scmp.eq.s32.totalorder %s15, 1
    %p122 = por %p120, %p121
    %p123 = scmp.ne.s32.totalorder %s112, %s113
    %p124 = scmp.eq.s32.totalorder %s15, 0
    %p125 = por %p123, %p124
    %p126 = scmp.ne.s32.totalorder %s112, %s113
    %p127 = scmp.eq.s32.totalorder %s16, 1
    %p128 = por %p126, %p127
    %p130 = scmp.ne.s32.totalorder %s113, %s129
    %p131 = scmp.eq.s32.totalorder %s16, 0
    %p132 = por %p130, %p131
    %p133 = scmp.le.s32.totalorder 1, %s10
    %p134 = scmp.lt.s32.totalorder %s10, 3
    %p135 = pnand %p133, %p134
    %p136 = pneg %p135
    // Predicated region
    $region9: #{spafe_forward.5} parent=5 // pred_check
      _
    $region10: #{spafe_forward.5} parent=5 // pred_check_branch
      %138 = sbr.rel (%p135) target = $region12
    $region11: #{spafe_forward.5} parent=5 // pred_region
      %s139 = ssub.s32 %s10, 1
      // Predicated region
      $region13: #{spafe_forward.5} parent=11 // pred_check
        %p140 = pneg %p57
      $region14: #{spafe_forward.5} parent=11 // pred_check_branch
        %142 = sbr.rel (%p140) target = $region16
      $region15: #{spafe_forward.5} parent=11 // pred_region
        _
      $region16: #{spafe_forward.5} parent=11 // pred_fallthru
        _
      // Predicated region
      $region17: #{spafe_forward.5} parent=11 // pred_check
        %p143 = pneg %p78
      $region18: #{spafe_forward.5} parent=11 // pred_check_branch
        %145 = sbr.rel (%p143) target = $region20
      $region19: #{spafe_forward.5} parent=11 // pred_region
        _
      $region20: #{spafe_forward.5} parent=11 // pred_fallthru
        _
      // Predicated region
      $region21: #{spafe_forward.5} parent=11 // pred_check
        %p146 = pneg %p99
      $region22: #{spafe_forward.5} parent=11 // pred_check_branch
        %148 = sbr.rel (%p146) target = $region24
      $region23: #{spafe_forward.5} parent=11 // pred_region
        _
      $region24: #{spafe_forward.5} parent=11 // pred_fallthru
        _
    $region12: #{spafe_forward.5} parent=5 // pred_fallthru
      _
    %p149 = scmp.lt.s32.totalorder %s10, 2
    // Predicated region
    $region25: #{spafe_forward.5} parent=5 // pred_check
      %p150 = pneg %p149
    $region26: #{spafe_forward.5} parent=5 // pred_check_branch
      %152 = sbr.rel (%p150) target = $region28
    $region27: #{spafe_forward.5} parent=5 // pred_region
      // Predicated region
      $region29: #{spafe_forward.5} parent=27 // pred_check
        %p153 = pneg %p30
      $region30: #{spafe_forward.5} parent=27 // pred_check_branch
        %155 = sbr.rel (%p153) target = $region32
      $region31: #{spafe_forward.5} parent=27 // pred_region
        %p156 = scmp.lt.s32.totalorder %s10, 1
        %s157 = scalar_select %p156, %s10, 1
        %s158 = smul.addr %s157, 70
        %s159 = smul.addr %s158, 4
        %s160 = scalar_lea.vmem %s0, %s159
      $region32: #{spafe_forward.5} parent=27 // pred_fallthru
        _
    $region28: #{spafe_forward.5} parent=5 // pred_fallthru
      _
    %p161 = scmp.le.s32.totalorder 1, %s10
    %p162 = scmp.lt.s32.totalorder %s10, 3
    %p163 = pnand %p161, %p162
    %p164 = pneg %p163
    // Predicated region
    $region33: #{spafe_forward.5} parent=5 // pred_check
      _
    $region34: #{spafe_forward.5} parent=5 // pred_check_branch
      %166 = sbr.rel (%p163) target = $region36
    $region35: #{spafe_forward.5} parent=5 // pred_region
      %s167 = ssub.s32 %s10, 1
      %p168 = scmp.lt.s32.totalorder %s15, 1
      %s169 = scalar_select %p168, %s15, 1
      %s170 = smul.addr %s169, 70
      %s171 = smul.addr %s170, 4
      %s172 = scalar_lea.vmem %s0, %s171
      %p173 = pneg %p36
      %p174 = pneg %p33
      %p175 = pneg %p57
      %p176 = pneg %p54
      %p177 = pneg %p78
      %p178 = pneg %p75
      %p179 = pneg %p99
      %p180 = pneg %p96
      %p181 = pneg %p125
      %p182 = pneg %p122
      %p183 = scmp.lt.s32.totalorder %s15, 1
      %s184 = scalar_select %p183, %s15, 1
      %s185 = smul.addr %s184, 16
      %s186 = smul.addr %s185, 8
      %s187 = scalar_lea.vmem %s4, %s186
      %p188 = scmp.lt.s32.totalorder %s15, 1
      %s189 = scalar_select %p188, %s15, 1
      %s190 = smul.addr %s189, 70
      %s191 = smul.addr %s190, 4
      %s192 = scalar_lea.vmem %s0, %s191
      %p193 = scmp.lt.s32.totalorder %s15, 1
      %s194 = scalar_select %p193, %s15, 1
      %s195 = smul.addr %s194, 16
      %s196 = smul.addr %s195, 8
      %s197 = scalar_lea.vmem %s4, %s196
      %v199 = vld [vmem:[%s1] sm:$0xff]
      %v200 = vld [vmem:[%s1 + $0x8] sm:$0xff]
      %v201 = vld [vmem:[%s1 + $0x10] sm:$0xf]
      %v202 = vld [vmem:[%s1 + $0x14] sm:$0xff]
      %v203 = vld [vmem:[%s1 + $0x1c] sm:$0xff]
      %v204 = vld [vmem:[%s1 + $0x24] sm:$0xf]
      %v205 = vld [vmem:[%s1 + $0x28] sm:$0xff]
      %v206 = vld [vmem:[%s1 + $0x30] sm:$0xff]
      %v207 = vld [vmem:[%s1 + $0x38] sm:$0xf]
      %v208 = vld [vmem:[%s1 + $0x3c] sm:$0xff]
      %v209 = vld [vmem:[%s1 + $0x44] sm:$0xff]
      %v210 = vld [vmem:[%s1 + $0x4c] sm:$0xf]
      %v211 = vld [vmem:[%s1 + $0x50] sm:$0xff]
      %v212 = vld [vmem:[%s1 + $0x58] sm:$0xff]
      %v213 = vld [vmem:[%s1 + $0x60] sm:$0xf]
      %v214 = vld [vmem:[%s1 + $0x64] sm:$0xff]
      %v215 = vld [vmem:[%s1 + $0x6c] sm:$0xff]
      %v216 = vld [vmem:[%s1 + $0x74] sm:$0xf]
      %v217 = vld [vmem:[%s1 + $0x78] sm:$0xff]
      %v218 = vld [vmem:[%s1 + $0x80] sm:$0xff]
      %v219 = vld [vmem:[%s1 + $0x88] sm:$0xf]
      %v220 = vld [vmem:[%s1 + $0x8c] sm:$0xff]
      %v221 = vld [vmem:[%s1 + $0x94] sm:$0xff]
      %v222 = vld [vmem:[%s1 + $0x9c] sm:$0xf]
      %v223 = vld [vmem:[%s1 + $0xa0] sm:$0xff]
      %v224 = vld [vmem:[%s1 + $0xa8] sm:$0xff]
      %v225 = vld [vmem:[%s1 + $0xb0] sm:$0xf]
      %v226 = vld [vmem:[%s1 + $0xb4] sm:$0xff]
      %v227 = vld [vmem:[%s1 + $0xbc] sm:$0xff]
      %v228 = vld [vmem:[%s1 + $0xc4] sm:$0xf]
      %v229 = vld [vmem:[%s1 + $0xc8] sm:$0xff]
      %v230 = vld [vmem:[%s1 + $0xd0] sm:$0xff]
      %v231 = vld [vmem:[%s1 + $0xd8] sm:$0xf]
      %v232 = vld [vmem:[%s1 + $0xdc] sm:$0xff]
      %v233 = vld [vmem:[%s1 + $0xe4] sm:$0xff]
      %v234 = vld [vmem:[%s1 + $0xec] sm:$0xf]
      %v235 = vld [vmem:[%s1 + $0xf0] sm:$0xff]
      %v236 = vld [vmem:[%s1 + $0xf8] sm:$0xff]
      %v237 = vld [vmem:[%s1 + $0x100] sm:$0xf]
      %v238 = vld [vmem:[%s1 + $0x104] sm:$0xff]
      %v239 = vld [vmem:[%s1 + $0x10c] sm:$0xff]
      %v240 = vld [vmem:[%s1 + $0x114] sm:$0xf]
      %v241 = vld [vmem:[%s1 + $0x118] sm:$0xff]
      %v242 = vld [vmem:[%s1 + $0x120] sm:$0xff]
      %v243 = vld [vmem:[%s1 + $0x128] sm:$0xf]
      %v244 = vld [vmem:[%s1 + $0x12c] sm:$0xff]
      %v245 = vld [vmem:[%s1 + $0x134] sm:$0xff]
      %v246 = vld [vmem:[%s1 + $0x13c] sm:$0xf]
      %v247 = vld [vmem:[%s192] sm:$0xf]
      %v248 = vld [vmem:[%s192 + $0x4] sm:$0xf]
      %v249 = vld [vmem:[%s192 + $0x8] sm:$0xf]
      %v250 = vld [vmem:[%s192 + $0xc] sm:$0xf]
      %v251 = vld [vmem:[%s192 + $0x10] sm:$0xf]
      %v252 = vld [vmem:[%s192 + $0x14] sm:$0xf]
      %v253 = vld [vmem:[%s192 + $0x18] sm:$0xf]
      %v254 = vld [vmem:[%s192 + $0x1c] sm:$0xf]
      %v255 = vld [vmem:[%s192 + $0x20] sm:$0xf]
      %v256 = vld [vmem:[%s192 + $0x24] sm:$0xf]
      %v257 = vld [vmem:[%s192 + $0x28] sm:$0xf]
      %v258 = vld [vmem:[%s192 + $0x2c] sm:$0xf]
      %v259 = vld [vmem:[%s192 + $0x30] sm:$0xf]
      %v260 = vld [vmem:[%s192 + $0x34] sm:$0xf]
      %v261 = vld [vmem:[%s192 + $0x38] sm:$0xf]
      %v262 = vld [vmem:[%s192 + $0x3c] sm:$0xf]
      %v263 = vld [vmem:[%s192 + $0x40] sm:$0xf]
      %v264 = vld [vmem:[%s192 + $0x44] sm:$0xf]
      %v265 = vld [vmem:[%s192 + $0x48] sm:$0xf]
      %v266 = vld [vmem:[%s192 + $0x4c] sm:$0xf]
      %v267 = vld [vmem:[%s192 + $0x50] sm:$0xf]
      %v268 = vld [vmem:[%s192 + $0x54] sm:$0xf]
      %v269 = vld [vmem:[%s192 + $0x58] sm:$0xf]
      %v270 = vld [vmem:[%s192 + $0x5c] sm:$0xf]
      %v271 = vld [vmem:[%s192 + $0x60] sm:$0xf]
      %v272 = vld [vmem:[%s192 + $0x64] sm:$0xf]
      %v273 = vld [vmem:[%s192 + $0x68] sm:$0xf]
      %v274 = vld [vmem:[%s192 + $0x6c] sm:$0xf]
      %v275 = vld [vmem:[%s192 + $0x70] sm:$0xf]
      %v276 = vld [vmem:[%s192 + $0x74] sm:$0xf]
      %v277 = vld [vmem:[%s192 + $0x78] sm:$0xf]
      %v278 = vld [vmem:[%s192 + $0x7c] sm:$0xf]
      %v279 = vld [vmem:[%s192 + $0x80] sm:$0xf]
      %v280 = vld [vmem:[%s192 + $0x84] sm:$0xf]
      %v281 = vld [vmem:[%s192 + $0x88] sm:$0xf]
      %v282 = vld [vmem:[%s192 + $0x8c] sm:$0xf]
      %v283 = vld [vmem:[%s192 + $0x90] sm:$0xf]
      %v284 = vld [vmem:[%s192 + $0x94] sm:$0xf]
      %v285 = vld [vmem:[%s192 + $0x98] sm:$0xf]
      %v286 = vld [vmem:[%s192 + $0x9c] sm:$0xf]
      %v287 = vld [vmem:[%s192 + $0xa0] sm:$0xf]
      %v288 = vld [vmem:[%s192 + $0xa4] sm:$0xf]
      %v289 = vld [vmem:[%s192 + $0xa8] sm:$0xf]
      %v290 = vld [vmem:[%s192 + $0xac] sm:$0xf]
      %v291 = vld [vmem:[%s192 + $0xb0] sm:$0xf]
      %v292 = vld [vmem:[%s192 + $0xb4] sm:$0xf]
      %v293 = vld [vmem:[%s192 + $0xb8] sm:$0xf]
      %v294 = vld [vmem:[%s192 + $0xbc] sm:$0xf]
      %v295 = vld [vmem:[%s192 + $0xc0] sm:$0xf]
      %v296 = vld [vmem:[%s192 + $0xc4] sm:$0xf]
      %v297 = vld [vmem:[%s192 + $0xc8] sm:$0xf]
      %v298 = vld [vmem:[%s192 + $0xcc] sm:$0xf]
      %v299 = vld [vmem:[%s192 + $0xd0] sm:$0xf]
      %v300 = vld [vmem:[%s192 + $0xd4] sm:$0xf]
      %v301 = vld [vmem:[%s192 + $0xd8] sm:$0xf]
      %v302 = vld [vmem:[%s192 + $0xdc] sm:$0xf]
      %v303 = vld [vmem:[%s192 + $0xe0] sm:$0xf]
      %v304 = vld [vmem:[%s192 + $0xe4] sm:$0xf]
      %v305 = vld [vmem:[%s192 + $0xe8] sm:$0xf]
      %v306 = vld [vmem:[%s192 + $0xec] sm:$0xf]
      %v307 = vld [vmem:[%s192 + $0xf0] sm:$0xf]
      %v308 = vld [vmem:[%s192 + $0xf4] sm:$0xf]
      %v309 = vld [vmem:[%s192 + $0xf8] sm:$0xf]
      %v310 = vld [vmem:[%s192 + $0xfc] sm:$0xf]
      %v311 = vld [vmem:[%s192 + $0x100] sm:$0xf]
      %v312 = vld [vmem:[%s192 + $0x104] sm:$0xf]
      %v313 = vld [vmem:[%s192 + $0x108] sm:$0xf]
      %v314 = vld [vmem:[%s192 + $0x10c] sm:$0xf]
      %v315 = vld [vmem:[%s192 + $0x110] sm:$0xf]
      %v316 = vld [vmem:[%s192 + $0x114] sm:$0xf]
      %v365 = vunpack.c.l.b16 %v199
      %v366 = vunpack.c.h.b16 %v199
      %v367 = vunpack.c.l.b16 %v200
      %v368 = vunpack.c.h.b16 %v200
      %v369 = vunpack.c.l.b16 %v201
      %v370 = vunpack.c.l.b16 %v202
      %v371 = vunpack.c.h.b16 %v202
      %v372 = vunpack.c.l.b16 %v203
      %v373 = vunpack.c.h.b16 %v203
      %v374 = vunpack.c.l.b16 %v204
      %v375 = vunpack.c.l.b16 %v205
      %v376 = vunpack.c.h.b16 %v205
      %v377 = vunpack.c.l.b16 %v206
      %v378 = vunpack.c.h.b16 %v206
      %v379 = vunpack.c.l.b16 %v207
      %v380 = vunpack.c.l.b16 %v208
      %v381 = vunpack.c.h.b16 %v208
      %v382 = vunpack.c.l.b16 %v209
      %v383 = vunpack.c.h.b16 %v209
      %v384 = vunpack.c.l.b16 %v210
      %v385 = vunpack.c.l.b16 %v211
      %v386 = vunpack.c.h.b16 %v211
      %v387 = vunpack.c.l.b16 %v212
      %v388 = vunpack.c.h.b16 %v212
      %v389 = vunpack.c.l.b16 %v213
      %v390 = vunpack.c.l.b16 %v214
      %v391 = vunpack.c.h.b16 %v214
      %v392 = vunpack.c.l.b16 %v215
      %v393 = vunpack.c.h.b16 %v215
      %v394 = vunpack.c.l.b16 %v216
      %v395 = vunpack.c.l.b16 %v217
      %v396 = vunpack.c.h.b16 %v217
      %v397 = vunpack.c.l.b16 %v218
      %v398 = vunpack.c.h.b16 %v218
      %v399 = vunpack.c.l.b16 %v219
      %v400 = vunpack.c.l.b16 %v220
      %v401 = vunpack.c.h.b16 %v220
      %v402 = vunpack.c.l.b16 %v221
      %v403 = vunpack.c.h.b16 %v221
      %v404 = vunpack.c.l.b16 %v222
      %v405 = vunpack.c.l.b16 %v223
      %v406 = vunpack.c.h.b16 %v223
      %v407 = vunpack.c.l.b16 %v224
      %v408 = vunpack.c.h.b16 %v224
      %v409 = vunpack.c.l.b16 %v225
      %v410 = vunpack.c.l.b16 %v226
      %v411 = vunpack.c.h.b16 %v226
      %v412 = vunpack.c.l.b16 %v227
      %v413 = vunpack.c.h.b16 %v227
      %v414 = vunpack.c.l.b16 %v228
      %v415 = vunpack.c.l.b16 %v229
      %v416 = vunpack.c.h.b16 %v229
      %v417 = vunpack.c.l.b16 %v230
      %v418 = vunpack.c.h.b16 %v230
      %v419 = vunpack.c.l.b16 %v231
      %v420 = vunpack.c.l.b16 %v232
      %v421 = vunpack.c.h.b16 %v232
      %v422 = vunpack.c.l.b16 %v233
      %v423 = vunpack.c.h.b16 %v233
      %v424 = vunpack.c.l.b16 %v234
      %v425 = vunpack.c.l.b16 %v235
      %v426 = vunpack.c.h.b16 %v235
      %v427 = vunpack.c.l.b16 %v236
      %v428 = vunpack.c.h.b16 %v236
      %v429 = vunpack.c.l.b16 %v237
      %v430 = vunpack.c.l.b16 %v238
      %v431 = vunpack.c.h.b16 %v238
      %v432 = vunpack.c.l.b16 %v239
      %v433 = vunpack.c.h.b16 %v239
      %v434 = vunpack.c.l.b16 %v240
      %v435 = vunpack.c.l.b16 %v241
      %v436 = vunpack.c.h.b16 %v241
      %v437 = vunpack.c.l.b16 %v242
      %v438 = vunpack.c.h.b16 %v242
      %v439 = vunpack.c.l.b16 %v243
      %v440 = vunpack.c.l.b16 %v244
      %v441 = vunpack.c.h.b16 %v244
      %v442 = vunpack.c.l.b16 %v245
      %v443 = vunpack.c.h.b16 %v245
      %v444 = vunpack.c.l.b16 %v246
      %v445 = vpack.c.b16 %v370, %v365
      %v446 = vpack.c.b16 %v371, %v366
      %v447 = vpack.c.b16 %v372, %v367
      %v448 = vpack.c.b16 %v373, %v368
      %v449 = vpack.c.b16 %v374, %v369
      %v450 = vpack.c.b16 %v380, %v375
      %v451 = vpack.c.b16 %v381, %v376
      %v452 = vpack.c.b16 %v382, %v377
      %v453 = vpack.c.b16 %v383, %v378
      %v454 = vpack.c.b16 %v384, %v379
      %v455 = vpack.c.b16 %v390, %v385
      %v456 = vpack.c.b16 %v391, %v386
      %v457 = vpack.c.b16 %v392, %v387
      %v458 = vpack.c.b16 %v393, %v388
      %v459 = vpack.c.b16 %v394, %v389
      %v460 = vpack.c.b16 %v400, %v395
      %v461 = vpack.c.b16 %v401, %v396
      %v462 = vpack.c.b16 %v402, %v397
      %v463 = vpack.c.b16 %v403, %v398
      %v464 = vpack.c.b16 %v404, %v399
      %v465 = vpack.c.b16 %v410, %v405
      %v466 = vpack.c.b16 %v411, %v406
      %v467 = vpack.c.b16 %v412, %v407
      %v468 = vpack.c.b16 %v413, %v408
      %v469 = vpack.c.b16 %v414, %v409
      %v470 = vpack.c.b16 %v420, %v415
      %v471 = vpack.c.b16 %v421, %v416
      %v472 = vpack.c.b16 %v422, %v417
      %v473 = vpack.c.b16 %v423, %v418
      %v474 = vpack.c.b16 %v424, %v419
      %v475 = vpack.c.b16 %v430, %v425
      %v476 = vpack.c.b16 %v431, %v426
      %v477 = vpack.c.b16 %v432, %v427
      %v478 = vpack.c.b16 %v433, %v428
      %v479 = vpack.c.b16 %v434, %v429
      %v480 = vpack.c.b16 %v440, %v435
      %v481 = vpack.c.b16 %v441, %v436
      %v482 = vpack.c.b16 %v442, %v437
      %v483 = vpack.c.b16 %v443, %v438
      %v484 = vpack.c.b16 %v444, %v439
      %v587 = vunpack.c.l.b16 %v247
      %v588 = vunpack.c.l.b16 %v248
      %v589 = vunpack.c.l.b16 %v249
      %v590 = vunpack.c.l.b16 %v250
      %v591 = vunpack.c.l.b16 %v251
      %v592 = vunpack.c.l.b16 %v252
      %v593 = vunpack.c.l.b16 %v253
      %v594 = vunpack.c.l.b16 %v254
      %v595 = vunpack.c.l.b16 %v255
      %v596 = vunpack.c.l.b16 %v256
      %v597 = vunpack.c.l.b16 %v257
      %v598 = vunpack.c.l.b16 %v258
      %v599 = vunpack.c.l.b16 %v259
      %v600 = vunpack.c.l.b16 %v260
      %v601 = vunpack.c.l.b16 %v261
      %v602 = vunpack.c.l.b16 %v262
      %v603 = vunpack.c.l.b16 %v263
      %v604 = vunpack.c.l.b16 %v264
      %v605 = vunpack.c.l.b16 %v265
      %v606 = vunpack.c.l.b16 %v266
      %v607 = vunpack.c.l.b16 %v267
      %v608 = vunpack.c.l.b16 %v268
      %v609 = vunpack.c.l.b16 %v269
      %v610 = vunpack.c.l.b16 %v270
      %v611 = vunpack.c.l.b16 %v271
      %v612 = vunpack.c.l.b16 %v272
      %v613 = vunpack.c.l.b16 %v273
      %v614 = vunpack.c.l.b16 %v274
      %v615 = vunpack.c.l.b16 %v275
      %v616 = vunpack.c.l.b16 %v276
      %v617 = vunpack.c.l.b16 %v277
      %v618 = vunpack.c.l.b16 %v278
      %v619 = vunpack.c.l.b16 %v279
      %v620 = vunpack.c.l.b16 %v280
      %v621 = vunpack.c.l.b16 %v281
      %v622 = vunpack.c.l.b16 %v282
      %v623 = vunpack.c.l.b16 %v283
      %v624 = vunpack.c.l.b16 %v284
      %v625 = vunpack.c.l.b16 %v285
      %v626 = vunpack.c.l.b16 %v286
      %v627 = vunpack.c.l.b16 %v287
      %v628 = vunpack.c.l.b16 %v288
      %v629 = vunpack.c.l.b16 %v289
      %v630 = vunpack.c.l.b16 %v290
      %v631 = vunpack.c.l.b16 %v291
      %v632 = vunpack.c.l.b16 %v292
      %v633 = vunpack.c.l.b16 %v293
      %v634 = vunpack.c.l.b16 %v294
      %v635 = vunpack.c.l.b16 %v295
      %v636 = vunpack.c.l.b16 %v296
      %v637 = vunpack.c.l.b16 %v297
      %v638 = vunpack.c.l.b16 %v298
      %v639 = vunpack.c.l.b16 %v299
      %v640 = vunpack.c.l.b16 %v300
      %v641 = vunpack.c.l.b16 %v301
      %v642 = vunpack.c.l.b16 %v302
      %v643 = vunpack.c.l.b16 %v303
      %v644 = vunpack.c.l.b16 %v304
      %v645 = vunpack.c.l.b16 %v305
      %v646 = vunpack.c.l.b16 %v306
      %v647 = vunpack.c.l.b16 %v307
      %v648 = vunpack.c.l.b16 %v308
      %v649 = vunpack.c.l.b16 %v309
      %v650 = vunpack.c.l.b16 %v310
      %v651 = vunpack.c.l.b16 %v311
      %v652 = vunpack.c.l.b16 %v312
      %v653 = vunpack.c.l.b16 %v313
      %v654 = vunpack.c.l.b16 %v314
      %v655 = vunpack.c.l.b16 %v315
      %v656 = vunpack.c.l.b16 %v316
      %v657 = vpack.c.b16 %v588, %v587
      %v658 = vpack.c.b16 %v590, %v589
      %v659 = vpack.c.b16 %v592, %v591
      %v660 = vpack.c.b16 %v594, %v593
      %v661 = vpack.c.b16 %v596, %v595
      %v662 = vpack.c.b16 %v598, %v597
      %v663 = vpack.c.b16 %v600, %v599
      %v664 = vpack.c.b16 %v602, %v601
      %v665 = vpack.c.b16 %v604, %v603
      %v666 = vpack.c.b16 %v606, %v605
      %v667 = vpack.c.b16 %v608, %v607
      %v668 = vpack.c.b16 %v610, %v609
      %v669 = vpack.c.b16 %v612, %v611
      %v670 = vpack.c.b16 %v614, %v613
      %v671 = vpack.c.b16 %v616, %v615
      %v672 = vpack.c.b16 %v618, %v617
      %v673 = vpack.c.b16 %v620, %v619
      %v674 = vpack.c.b16 %v622, %v621
      %v675 = vpack.c.b16 %v624, %v623
      %v676 = vpack.c.b16 %v626, %v625
      %v677 = vpack.c.b16 %v628, %v627
      %v678 = vpack.c.b16 %v630, %v629
      %v679 = vpack.c.b16 %v632, %v631
      %v680 = vpack.c.b16 %v634, %v633
      %v681 = vpack.c.b16 %v636, %v635
      %v682 = vpack.c.b16 %v638, %v637
      %v683 = vpack.c.b16 %v640, %v639
      %v684 = vpack.c.b16 %v642, %v641
      %v685 = vpack.c.b16 %v644, %v643
      %v686 = vpack.c.b16 %v646, %v645
      %v687 = vpack.c.b16 %v648, %v647
      %v688 = vpack.c.b16 %v650, %v649
      %v689 = vpack.c.b16 %v652, %v651
      %v690 = vpack.c.b16 %v654, %v653
      %v691 = vpack.c.b16 %v656, %v655
      %vm727 = vcmask 392192
      %v729 = vsel %vm727, %v449, 0
      %v732 = vsel %vm727, %v454, 0
      %v735 = vsel %vm727, %v459, 0
      %v738 = vsel %vm727, %v464, 0
      %v741 = vsel %vm727, %v469, 0
      %v744 = vsel %vm727, %v474, 0
      %v747 = vsel %vm727, %v479, 0
      %v750 = vsel %vm727, %v484, 0
      %752 = vmatprep.subr.bf16.mxu0 0
      %753 = vmatpush1.bf16.msra.mxu0 %v657
      %754 = vmatprep.subr.bf16.mxu0 0
      %755 = vmatpush1.bf16.msra.mxu0 %v658
      %756 = vmatprep.subr.bf16.mxu0 0
      %757 = vmatpush1.bf16.msra.mxu0 %v659
      %758 = vmatprep.subr.bf16.mxu0 0
      %759 = vmatpush1.bf16.msra.mxu0 %v660
      %760 = vmatprep.subr.bf16.mxu0 0
      %761 = vmatpush1.bf16.msra.mxu0 %v661
      %762 = vmatprep.subr.bf16.mxu0 0
      %763 = vmatpush1.bf16.msra.mxu0 %v662
      %764 = vmatprep.subr.bf16.mxu0 0
      %765 = vmatpush1.bf16.msra.mxu0 %v663
      %766 = vmatprep.subr.bf16.mxu0 0
      %767 = vmatpush1.bf16.msra.mxu0 %v664
      %768 = vmatprep.subr.bf16.mxu0 0
      %769 = vmatpush1.bf16.msra.mxu0 %v665
      %770 = vmatprep.subr.bf16.mxu0 0
      %771 = vmatpush1.bf16.msra.mxu0 %v666
      %772 = vmatprep.subr.bf16.mxu0 0
      %773 = vmatpush1.bf16.msra.mxu0 %v667
      %774 = vmatprep.subr.bf16.mxu0 0
      %775 = vmatpush1.bf16.msra.mxu0 %v668
      %776 = vmatprep.subr.bf16.mxu0 0
      %777 = vmatpush1.bf16.msra.mxu0 %v669
      %778 = vmatprep.subr.bf16.mxu0 0
      %779 = vmatpush1.bf16.msra.mxu0 %v670
      %780 = vmatprep.subr.bf16.mxu0 0
      %781 = vmatpush1.bf16.msra.mxu0 %v671
      %782 = vmatprep.subr.bf16.mxu0 0
      %783 = vmatpush1.bf16.msra.mxu0 %v672
      %784 = vmatprep.mubr.bf16.mxu0 %v446
      %785 = vmatmul.mubr.bf16.gmra.mrb[0].mxu0 %v445
      %v786 = vpop.f32.mrb[0].mxu0
      %v787 = vadd.f32 0.0, %v786
      %v788 = vpop.f32.mrb[0].mxu0
      %v789 = vpop.f32.mrb[0].mxu0
      %v790 = vadd.f32 0.0, %v789
      %v791 = vpop.f32.mrb[0].mxu0
      %792 = vmatprep.mubr.bf16.mxu0 %v451
      %793 = vmatmul.mubr.bf16.gmra.mrb[0].mxu0 %v450
      %v794 = vpop.f32.mrb[0].mxu0
      %v795 = vadd.f32 0.0, %v794
      %v796 = vpop.f32.mrb[0].mxu0
      %v797 = vpop.f32.mrb[0].mxu0
      %v798 = vadd.f32 0.0, %v797
      %v799 = vpop.f32.mrb[0].mxu0
      %800 = vmatprep.mubr.bf16.mxu0 %v456
      %801 = vmatmul.mubr.bf16.gmra.mrb[0].mxu0 %v455
      %v802 = vpop.f32.mrb[0].mxu0
      %v803 = vadd.f32 0.0, %v802
      %v804 = vpop.f32.mrb[0].mxu0
      %v805 = vpop.f32.mrb[0].mxu0
      %v806 = vadd.f32 0.0, %v805
      %v807 = vpop.f32.mrb[0].mxu0
      %808 = vmatprep.mubr.bf16.mxu0 %v461
      %809 = vmatmul.mubr.bf16.gmra.mrb[0].mxu0 %v460
      %v810 = vpop.f32.mrb[0].mxu0
      %v811 = vadd.f32 0.0, %v810
      %v812 = vpop.f32.mrb[0].mxu0
      %v813 = vpop.f32.mrb[0].mxu0
      %v814 = vadd.f32 0.0, %v813
      %v815 = vpop.f32.mrb[0].mxu0
      %816 = vmatprep.mubr.bf16.mxu0 %v466
      %817 = vmatmul.mubr.bf16.gmra.mrb[0].mxu0 %v465
      %v818 = vpop.f32.mrb[0].mxu0
      %v819 = vadd.f32 0.0, %v818
      %v820 = vpop.f32.mrb[0].mxu0
      %v821 = vpop.f32.mrb[0].mxu0
      %v822 = vadd.f32 0.0, %v821
      %v823 = vpop.f32.mrb[0].mxu0
      %824 = vmatprep.mubr.bf16.mxu0 %v471
      %825 = vmatmul.mubr.bf16.gmra.mrb[0].mxu0 %v470
      %v826 = vpop.f32.mrb[0].mxu0
      %v827 = vadd.f32 0.0, %v826
      %v828 = vpop.f32.mrb[0].mxu0
      %v829 = vpop.f32.mrb[0].mxu0
      %v830 = vadd.f32 0.0, %v829
      %v831 = vpop.f32.mrb[0].mxu0
      %832 = vmatprep.mubr.bf16.mxu0 %v476
      %833 = vmatmul.mubr.bf16.gmra.mrb[0].mxu0 %v475
      %v834 = vpop.f32.mrb[0].mxu0
      %v835 = vadd.f32 0.0, %v834
      %v836 = vpop.f32.mrb[0].mxu0
      %v837 = vpop.f32.mrb[0].mxu0
      %v838 = vadd.f32 0.0, %v837
      %v839 = vpop.f32.mrb[0].mxu0
      %840 = vmatprep.mubr.bf16.mxu0 %v481
      %841 = vmatmul.mubr.bf16.gmra.mrb[0].mxu0 %v480
      %v842 = vpop.f32.mrb[0].mxu0
      %v843 = vadd.f32 0.0, %v842
      %v844 = vpop.f32.mrb[0].mxu0
      %v845 = vpop.f32.mrb[0].mxu0
      %v846 = vadd.f32 0.0, %v845
      %v847 = vpop.f32.mrb[0].mxu0
      %848 = vdwg.mxu0
      %849 = vmatprep.subr.bf16.mxu0 0
      %850 = vmatpush1.bf16.msra.mxu0 %v673
      %851 = vmatprep.subr.bf16.mxu0 0
      %852 = vmatpush1.bf16.msra.mxu0 %v674
      %853 = vmatprep.subr.bf16.mxu0 0
      %854 = vmatpush1.bf16.msra.mxu0 %v675
      %855 = vmatprep.subr.bf16.mxu0 0
      %856 = vmatpush1.bf16.msra.mxu0 %v676
      %857 = vmatprep.subr.bf16.mxu0 0
      %858 = vmatpush1.bf16.msra.mxu0 %v677
      %859 = vmatprep.subr.bf16.mxu0 0
      %860 = vmatpush1.bf16.msra.mxu0 %v678
      %861 = vmatprep.subr.bf16.mxu0 0
      %862 = vmatpush1.bf16.msra.mxu0 %v679
      %863 = vmatprep.subr.bf16.mxu0 0
      %864 = vmatpush1.bf16.msra.mxu0 %v680
      %865 = vmatprep.subr.bf16.mxu0 0
      %866 = vmatpush1.bf16.msra.mxu0 %v681
      %867 = vmatprep.subr.bf16.mxu0 0
      %868 = vmatpush1.bf16.msra.mxu0 %v682
      %869 = vmatprep.subr.bf16.mxu0 0
      %870 = vmatpush1.bf16.msra.mxu0 %v683
      %871 = vmatprep.subr.bf16.mxu0 0
      %872 = vmatpush1.bf16.msra.mxu0 %v684
      %873 = vmatprep.subr.bf16.mxu0 0
      %874 = vmatpush1.bf16.msra.mxu0 %v685
      %875 = vmatprep.subr.bf16.mxu0 0
      %876 = vmatpush1.bf16.msra.mxu0 %v686
      %877 = vmatprep.subr.bf16.mxu0 0
      %878 = vmatpush1.bf16.msra.mxu0 %v687
      %879 = vmatprep.subr.bf16.mxu0 0
      %880 = vmatpush1.bf16.msra.mxu0 %v688
      %881 = vmatprep.mubr.bf16.mxu0 %v448
      %882 = vmatmul.mubr.bf16.gmra.mrb[0].mxu0 %v447
      %v883 = vpop.f32.mrb[0].mxu0
      %v884 = vadd.f32 %v787, %v883
      %v885 = vpop.f32.mrb[0].mxu0
      %v886 = vpop.f32.mrb[0].mxu0
      %v887 = vadd.f32 %v790, %v886
      %v888 = vpop.f32.mrb[0].mxu0
      %889 = vmatprep.mubr.bf16.mxu0 %v453
      %890 = vmatmul.mubr.bf16.gmra.mrb[0].mxu0 %v452
      %v891 = vpop.f32.mrb[0].mxu0
      %v892 = vadd.f32 %v795, %v891
      %v893 = vpop.f32.mrb[0].mxu0
      %v894 = vpop.f32.mrb[0].mxu0
      %v895 = vadd.f32 %v798, %v894
      %v896 = vpop.f32.mrb[0].mxu0
      %897 = vmatprep.mubr.bf16.mxu0 %v458
      %898 = vmatmul.mubr.bf16.gmra.mrb[0].mxu0 %v457
      %v899 = vpop.f32.mrb[0].mxu0
      %v900 = vadd.f32 %v803, %v899
      %v901 = vpop.f32.mrb[0].mxu0
      %v902 = vpop.f32.mrb[0].mxu0
      %v903 = vadd.f32 %v806, %v902
      %v904 = vpop.f32.mrb[0].mxu0
      %905 = vmatprep.mubr.bf16.mxu0 %v463
      %906 = vmatmul.mubr.bf16.gmra.mrb[0].mxu0 %v462
      %v907 = vpop.f32.mrb[0].mxu0
      %v908 = vadd.f32 %v811, %v907
      %v909 = vpop.f32.mrb[0].mxu0
      %v910 = vpop.f32.mrb[0].mxu0
      %v911 = vadd.f32 %v814, %v910
      %v912 = vpop.f32.mrb[0].mxu0
      %913 = vmatprep.mubr.bf16.mxu0 %v468
      %914 = vmatmul.mubr.bf16.gmra.mrb[0].mxu0 %v467
      %v915 = vpop.f32.mrb[0].mxu0
      %v916 = vadd.f32 %v819, %v915
      %v917 = vpop.f32.mrb[0].mxu0
      %v918 = vpop.f32.mrb[0].mxu0
      %v919 = vadd.f32 %v822, %v918
      %v920 = vpop.f32.mrb[0].mxu0
      %921 = vmatprep.mubr.bf16.mxu0 %v473
      %922 = vmatmul.mubr.bf16.gmra.mrb[0].mxu0 %v472
      %v923 = vpop.f32.mrb[0].mxu0
      %v924 = vadd.f32 %v827, %v923
      %v925 = vpop.f32.mrb[0].mxu0
      %v926 = vpop.f32.mrb[0].mxu0
      %v927 = vadd.f32 %v830, %v926
      %v928 = vpop.f32.mrb[0].mxu0
      %929 = vmatprep.mubr.bf16.mxu0 %v478
      %930 = vmatmul.mubr.bf16.gmra.mrb[0].mxu0 %v477
      %v931 = vpop.f32.mrb[0].mxu0
      %v932 = vadd.f32 %v835, %v931
      %v933 = vpop.f32.mrb[0].mxu0
      %v934 = vpop.f32.mrb[0].mxu0
      %v935 = vadd.f32 %v838, %v934
      %v936 = vpop.f32.mrb[0].mxu0
      %937 = vmatprep.mubr.bf16.mxu0 %v483
      %938 = vmatmul.mubr.bf16.gmra.mrb[0].mxu0 %v482
      %v939 = vpop.f32.mrb[0].mxu0
      %v940 = vadd.f32 %v843, %v939
      %v941 = vpop.f32.mrb[0].mxu0
      %v942 = vpop.f32.mrb[0].mxu0
      %v943 = vadd.f32 %v846, %v942
      %v944 = vpop.f32.mrb[0].mxu0
      %945 = vdwg.mxu0
      %946 = vmatprep.subr.bf16.mxu0 0
      %947 = vmatpush1.bf16.msra.mxu0 %v689
      %948 = vmatprep.subr.bf16.mxu0 0
      %949 = vmatpush1.bf16.msra.mxu0 %v690
      %950 = vmatprep.subr.bf16.mxu0 0
      %951 = vmatpush1.bf16.msra.mxu0 %v691
      %952 = vmatprep.subr.bf16.mxu0 0
      %953 = vmatpush1.bf16.msra.mxu0 0
      %954 = vmatprep.subr.bf16.mxu0 0
      %955 = vmatpush1.bf16.msra.mxu0 0
      %956 = vmatprep.subr.bf16.mxu0 0
      %957 = vmatpush1.bf16.msra.mxu0 0
      %958 = vmatprep.subr.bf16.mxu0 0
      %959 = vmatpush1.bf16.msra.mxu0 0
      %960 = vmatprep.subr.bf16.mxu0 0
      %961 = vmatpush1.bf16.msra.mxu0 0
      %962 = vmatprep.subr.bf16.mxu0 0
      %963 = vmatpush1.bf16.msra.mxu0 0
      %964 = vmatprep.subr.bf16.mxu0 0
      %965 = vmatpush1.bf16.msra.mxu0 0
      %966 = vmatprep.subr.bf16.mxu0 0
      %967 = vmatpush1.bf16.msra.mxu0 0
      %968 = vmatprep.subr.bf16.mxu0 0
      %969 = vmatpush1.bf16.msra.mxu0 0
      %970 = vmatprep.subr.bf16.mxu0 0
      %971 = vmatpush1.bf16.msra.mxu0 0
      %972 = vmatprep.subr.bf16.mxu0 0
      %973 = vmatpush1.bf16.msra.mxu0 0
      %974 = vmatprep.subr.bf16.mxu0 0
      %975 = vmatpush1.bf16.msra.mxu0 0
      %976 = vmatprep.subr.bf16.mxu0 0
      %977 = vmatpush1.bf16.msra.mxu0 0
      %978 = vmatprep.mubr.bf16.mxu0 0
      %979 = vmatmul.mubr.bf16.gmra.mrb[0].mxu0 %v729
      %v980 = vpop.f32.mrb[0].mxu0
      %v981 = vadd.f32 %v884, %v980
      %v982 = vpop.f32.mrb[0].mxu0
      %v983 = vpop.f32.mrb[0].mxu0
      %v984 = vadd.f32 %v887, %v983
      %v985 = vpop.f32.mrb[0].mxu0
      %986 = vmatprep.mubr.bf16.mxu0 0
      %987 = vmatmul.mubr.bf16.gmra.mrb[0].mxu0 %v732
      %v988 = vpop.f32.mrb[0].mxu0
      %v989 = vadd.f32 %v892, %v988
      %v990 = vpop.f32.mrb[0].mxu0
      %v991 = vpop.f32.mrb[0].mxu0
      %v992 = vadd.f32 %v895, %v991
      %v993 = vpop.f32.mrb[0].mxu0
      %994 = vmatprep.mubr.bf16.mxu0 0
      %995 = vmatmul.mubr.bf16.gmra.mrb[0].mxu0 %v735
      %v996 = vpop.f32.mrb[0].mxu0
      %v997 = vadd.f32 %v900, %v996
      %v998 = vpop.f32.mrb[0].mxu0
      %v999 = vpop.f32.mrb[0].mxu0
      %v1000 = vadd.f32 %v903, %v999
      %v1001 = vpop.f32.mrb[0].mxu0
      %1002 = vmatprep.mubr.bf16.mxu0 0
      %1003 = vmatmul.mubr.bf16.gmra.mrb[0].mxu0 %v738
      %v1004 = vpop.f32.mrb[0].mxu0
      %v1005 = vadd.f32 %v908, %v1004
      %v1006 = vpop.f32.mrb[0].mxu0
      %v1007 = vpop.f32.mrb[0].mxu0
      %v1008 = vadd.f32 %v911, %v1007
      %v1009 = vpop.f32.mrb[0].mxu0
      %1010 = vmatprep.mubr.bf16.mxu0 0
      %1011 = vmatmul.mubr.bf16.gmra.mrb[0].mxu0 %v741
      %v1012 = vpop.f32.mrb[0].mxu0
      %v1013 = vadd.f32 %v916, %v1012
      %v1014 = vpop.f32.mrb[0].mxu0
      %v1015 = vpop.f32.mrb[0].mxu0
      %v1016 = vadd.f32 %v919, %v1015
      %v1017 = vpop.f32.mrb[0].mxu0
      %1018 = vmatprep.mubr.bf16.mxu0 0
      %1019 = vmatmul.mubr.bf16.gmra.mrb[0].mxu0 %v744
      %v1020 = vpop.f32.mrb[0].mxu0
      %v1021 = vadd.f32 %v924, %v1020
      %v1022 = vpop.f32.mrb[0].mxu0
      %v1023 = vpop.f32.mrb[0].mxu0
      %v1024 = vadd.f32 %v927, %v1023
      %v1025 = vpop.f32.mrb[0].mxu0
      %1026 = vmatprep.mubr.bf16.mxu0 0
      %1027 = vmatmul.mubr.bf16.gmra.mrb[0].mxu0 %v747
      %v1028 = vpop.f32.mrb[0].mxu0
      %v1029 = vadd.f32 %v932, %v1028
      %v1030 = vpop.f32.mrb[0].mxu0
      %v1031 = vpop.f32.mrb[0].mxu0
      %v1032 = vadd.f32 %v935, %v1031
      %v1033 = vpop.f32.mrb[0].mxu0
      %1034 = vmatprep.mubr.bf16.mxu0 0
      %1035 = vmatmul.mubr.bf16.gmra.mrb[0].mxu0 %v750
      %v1036 = vpop.f32.mrb[0].mxu0
      %v1037 = vadd.f32 %v940, %v1036
      %v1038 = vpop.f32.mrb[0].mxu0
      %v1039 = vpop.f32.mrb[0].mxu0
      %v1040 = vadd.f32 %v943, %v1039
      %v1041 = vpop.f32.mrb[0].mxu0
      %1042 = vdwg.mxu0
      %v1043 = vld [vmem:[%s2] sm:$0xff]
      %v1044 = vld [vmem:[%s2 + $0x8] sm:$0xff]
      %v1045 = vld [vmem:[%s2 + $0x10] sm:$0xff]
      %v1046 = vld [vmem:[%s2 + $0x18] sm:$0xff]
      %v1047 = vld [vmem:[%s2 + $0x20] sm:$0xff]
      %v1048 = vld [vmem:[%s2 + $0x28] sm:$0xff]
      %v1049 = vld [vmem:[%s2 + $0x30] sm:$0xff]
      %v1050 = vld [vmem:[%s2 + $0x38] sm:$0xff]
      %v1051 = vld [vmem:[%s2 + $0x40] sm:$0xff]
      %v1052 = vld [vmem:[%s2 + $0x48] sm:$0xff]
      %v1053 = vld [vmem:[%s2 + $0x50] sm:$0xff]
      %v1054 = vld [vmem:[%s2 + $0x58] sm:$0xff]
      %v1055 = vld [vmem:[%s2 + $0x60] sm:$0xff]
      %v1056 = vld [vmem:[%s2 + $0x68] sm:$0xff]
      %v1057 = vld [vmem:[%s2 + $0x70] sm:$0xff]
      %v1058 = vld [vmem:[%s2 + $0x78] sm:$0xff]
      %1060 = vset.pattern.permute.xlu0 0
      %1061 = vperm.xlu0 %1060, %v1043
      %v1062 = vpop.permute.xlu0 %1061
      %1065 = vset.pattern.permute.xlu0 0
      %1066 = vperm.xlu0 %1065, %v1044
      %v1067 = vpop.permute.xlu0 %1066
      %1070 = vset.pattern.permute.xlu0 0
      %1071 = vperm.xlu0 %1070, %v1045
      %v1072 = vpop.permute.xlu0 %1071
      %1075 = vset.pattern.permute.xlu0 0
      %1076 = vperm.xlu0 %1075, %v1046
      %v1077 = vpop.permute.xlu0 %1076
      %1080 = vset.pattern.permute.xlu0 0
      %1081 = vperm.xlu0 %1080, %v1047
      %v1082 = vpop.permute.xlu0 %1081
      %1085 = vset.pattern.permute.xlu0 0
      %1086 = vperm.xlu0 %1085, %v1048
      %v1087 = vpop.permute.xlu0 %1086
      %1090 = vset.pattern.permute.xlu0 0
      %1091 = vperm.xlu0 %1090, %v1049
      %v1092 = vpop.permute.xlu0 %1091
      %1095 = vset.pattern.permute.xlu0 0
      %1096 = vperm.xlu0 %1095, %v1050
      %v1097 = vpop.permute.xlu0 %1096
      %1100 = vset.pattern.permute.xlu0 0
      %1101 = vperm.xlu0 %1100, %v1051
      %v1102 = vpop.permute.xlu0 %1101
      %1105 = vset.pattern.permute.xlu0 0
      %1106 = vperm.xlu0 %1105, %v1052
      %v1107 = vpop.permute.xlu0 %1106
      %1110 = vset.pattern.permute.xlu0 0
      %1111 = vperm.xlu0 %1110, %v1053
      %v1112 = vpop.permute.xlu0 %1111
      %1115 = vset.pattern.permute.xlu0 0
      %1116 = vperm.xlu0 %1115, %v1054
      %v1117 = vpop.permute.xlu0 %1116
      %1120 = vset.pattern.permute.xlu0 0
      %1121 = vperm.xlu0 %1120, %v1055
      %v1122 = vpop.permute.xlu0 %1121
      %1125 = vset.pattern.permute.xlu0 0
      %1126 = vperm.xlu0 %1125, %v1056
      %v1127 = vpop.permute.xlu0 %1126
      %1130 = vset.pattern.permute.xlu0 0
      %1131 = vperm.xlu0 %1130, %v1057
      %v1132 = vpop.permute.xlu0 %1131
      %1135 = vset.pattern.permute.xlu0 0
      %1136 = vperm.xlu0 %1135, %v1058
      %v1137 = vpop.permute.xlu0 %1136
      %v1139 = vmul.f32 %v981, %v1062
      %v1140 = vmul.f32 %v984, %v1067
      %v1141 = vmul.f32 %v989, %v1072
      %v1142 = vmul.f32 %v992, %v1077
      %v1143 = vmul.f32 %v997, %v1082
      %v1144 = vmul.f32 %v1000, %v1087
      %v1145 = vmul.f32 %v1005, %v1092
      %v1146 = vmul.f32 %v1008, %v1097
      %v1147 = vmul.f32 %v1013, %v1102
      %v1148 = vmul.f32 %v1016, %v1107
      %v1149 = vmul.f32 %v1021, %v1112
      %v1150 = vmul.f32 %v1024, %v1117
      %v1151 = vmul.f32 %v1029, %v1122
      %v1152 = vmul.f32 %v1032, %v1127
      %v1153 = vmul.f32 %v1037, %v1132
      %v1154 = vmul.f32 %v1040, %v1137
      %v1155 = vld [vmem:[%s3] sm:$0xff]
      %v1156 = vld [vmem:[%s3 + $0x8] sm:$0xff]
      %v1157 = vld [vmem:[%s3 + $0x10] sm:$0xff]
      %v1158 = vld [vmem:[%s3 + $0x18] sm:$0xff]
      %v1159 = vld [vmem:[%s3 + $0x20] sm:$0xff]
      %v1160 = vld [vmem:[%s3 + $0x28] sm:$0xff]
      %v1161 = vld [vmem:[%s3 + $0x30] sm:$0xff]
      %v1162 = vld [vmem:[%s3 + $0x38] sm:$0xff]
      %v1163 = vld [vmem:[%s3 + $0x40] sm:$0xff]
      %v1164 = vld [vmem:[%s3 + $0x48] sm:$0xff]
      %v1165 = vld [vmem:[%s3 + $0x50] sm:$0xff]
      %v1166 = vld [vmem:[%s3 + $0x58] sm:$0xff]
      %v1167 = vld [vmem:[%s3 + $0x60] sm:$0xff]
      %v1168 = vld [vmem:[%s3 + $0x68] sm:$0xff]
      %v1169 = vld [vmem:[%s3 + $0x70] sm:$0xff]
      %v1170 = vld [vmem:[%s3 + $0x78] sm:$0xff]
      %1172 = vset.pattern.permute.xlu0 0
      %1173 = vperm.xlu0 %1172, %v1155
      %v1174 = vpop.permute.xlu0 %1173
      %1177 = vset.pattern.permute.xlu0 0
      %1178 = vperm.xlu0 %1177, %v1156
      %v1179 = vpop.permute.xlu0 %1178
      %1182 = vset.pattern.permute.xlu0 0
      %1183 = vperm.xlu0 %1182, %v1157
      %v1184 = vpop.permute.xlu0 %1183
      %1187 = vset.pattern.permute.xlu0 0
      %1188 = vperm.xlu0 %1187, %v1158
      %v1189 = vpop.permute.xlu0 %1188
      %1192 = vset.pattern.permute.xlu0 0
      %1193 = vperm.xlu0 %1192, %v1159
      %v1194 = vpop.permute.xlu0 %1193
      %1197 = vset.pattern.permute.xlu0 0
      %1198 = vperm.xlu0 %1197, %v1160
      %v1199 = vpop.permute.xlu0 %1198
      %1202 = vset.pattern.permute.xlu0 0
      %1203 = vperm.xlu0 %1202, %v1161
      %v1204 = vpop.permute.xlu0 %1203
      %1207 = vset.pattern.permute.xlu0 0
      %1208 = vperm.xlu0 %1207, %v1162
      %v1209 = vpop.permute.xlu0 %1208
      %1212 = vset.pattern.permute.xlu0 0
      %1213 = vperm.xlu0 %1212, %v1163
      %v1214 = vpop.permute.xlu0 %1213
      %1217 = vset.pattern.permute.xlu0 0
      %1218 = vperm.xlu0 %1217, %v1164
      %v1219 = vpop.permute.xlu0 %1218
      %1222 = vset.pattern.permute.xlu0 0
      %1223 = vperm.xlu0 %1222, %v1165
      %v1224 = vpop.permute.xlu0 %1223
      %1227 = vset.pattern.permute.xlu0 0
      %1228 = vperm.xlu0 %1227, %v1166
      %v1229 = vpop.permute.xlu0 %1228
      %1232 = vset.pattern.permute.xlu0 0
      %1233 = vperm.xlu0 %1232, %v1167
      %v1234 = vpop.permute.xlu0 %1233
      %1237 = vset.pattern.permute.xlu0 0
      %1238 = vperm.xlu0 %1237, %v1168
      %v1239 = vpop.permute.xlu0 %1238
      %1242 = vset.pattern.permute.xlu0 0
      %1243 = vperm.xlu0 %1242, %v1169
      %v1244 = vpop.permute.xlu0 %1243
      %1247 = vset.pattern.permute.xlu0 0
      %1248 = vperm.xlu0 %1247, %v1170
      %v1249 = vpop.permute.xlu0 %1248
      %v1251 = vadd.f32 %v1139, %v1174
      %v1252 = vadd.f32 %v1140, %v1179
      %v1253 = vadd.f32 %v1141, %v1184
      %v1254 = vadd.f32 %v1142, %v1189
      %v1255 = vadd.f32 %v1143, %v1194
      %v1256 = vadd.f32 %v1144, %v1199
      %v1257 = vadd.f32 %v1145, %v1204
      %v1258 = vadd.f32 %v1146, %v1209
      %v1259 = vadd.f32 %v1147, %v1214
      %v1260 = vadd.f32 %v1148, %v1219
      %v1261 = vadd.f32 %v1149, %v1224
      %v1262 = vadd.f32 %v1150, %v1229
      %v1263 = vadd.f32 %v1151, %v1234
      %v1264 = vadd.f32 %v1152, %v1239
      %v1265 = vadd.f32 %v1153, %v1244
      %v1266 = vadd.f32 %v1154, %v1249
      %v1267 = vmax.f32 %v1251, 0.0
      %v1268 = vmax.f32 %v1252, 0.0
      %v1269 = vmax.f32 %v1253, 0.0
      %v1270 = vmax.f32 %v1254, 0.0
      %v1271 = vmax.f32 %v1255, 0.0
      %v1272 = vmax.f32 %v1256, 0.0
      %v1273 = vmax.f32 %v1257, 0.0
      %v1274 = vmax.f32 %v1258, 0.0
      %v1275 = vmax.f32 %v1259, 0.0
      %v1276 = vmax.f32 %v1260, 0.0
      %v1277 = vmax.f32 %v1261, 0.0
      %v1278 = vmax.f32 %v1262, 0.0
      %v1279 = vmax.f32 %v1263, 0.0
      %v1280 = vmax.f32 %v1264, 0.0
      %v1281 = vmax.f32 %v1265, 0.0
      %v1282 = vmax.f32 %v1266, 0.0
      %1299 = vrot.lane.b32.xlu0 %v1267, 112
      %v1300 = vpop.permute.xlu0 %1299
      %1301 = vrot.lane.b32.xlu0 %v1268, 112
      %v1302 = vpop.permute.xlu0 %1301
      %1303 = vrot.lane.b32.xlu0 %v1269, 112
      %v1304 = vpop.permute.xlu0 %1303
      %1305 = vrot.lane.b32.xlu0 %v1270, 112
      %v1306 = vpop.permute.xlu0 %1305
      %1307 = vrot.lane.b32.xlu0 %v1271, 112
      %v1308 = vpop.permute.xlu0 %1307
      %1309 = vrot.lane.b32.xlu0 %v1272, 112
      %v1310 = vpop.permute.xlu0 %1309
      %1311 = vrot.lane.b32.xlu0 %v1273, 112
      %v1312 = vpop.permute.xlu0 %1311
      %1313 = vrot.lane.b32.xlu0 %v1274, 112
      %v1314 = vpop.permute.xlu0 %1313
      %1315 = vrot.lane.b32.xlu0 %v1275, 112
      %v1316 = vpop.permute.xlu0 %1315
      %1317 = vrot.lane.b32.xlu0 %v1276, 112
      %v1318 = vpop.permute.xlu0 %1317
      %1319 = vrot.lane.b32.xlu0 %v1277, 112
      %v1320 = vpop.permute.xlu0 %1319
      %1321 = vrot.lane.b32.xlu0 %v1278, 112
      %v1322 = vpop.permute.xlu0 %1321
      %1323 = vrot.lane.b32.xlu0 %v1279, 112
      %v1324 = vpop.permute.xlu0 %1323
      %1325 = vrot.lane.b32.xlu0 %v1280, 112
      %v1326 = vpop.permute.xlu0 %1325
      %1327 = vrot.lane.b32.xlu0 %v1281, 112
      %v1328 = vpop.permute.xlu0 %1327
      %1329 = vrot.lane.b32.xlu0 %v1282, 112
      %v1330 = vpop.permute.xlu0 %1329
      %v1347 = vmax.f32 %v1267, %v1300
      %v1348 = vmax.f32 %v1268, %v1302
      %v1349 = vmax.f32 %v1269, %v1304
      %v1350 = vmax.f32 %v1270, %v1306
      %v1351 = vmax.f32 %v1271, %v1308
      %v1352 = vmax.f32 %v1272, %v1310
      %v1353 = vmax.f32 %v1273, %v1312
      %v1354 = vmax.f32 %v1274, %v1314
      %v1355 = vmax.f32 %v1275, %v1316
      %v1356 = vmax.f32 %v1276, %v1318
      %v1357 = vmax.f32 %v1277, %v1320
      %v1358 = vmax.f32 %v1278, %v1322
      %v1359 = vmax.f32 %v1279, %v1324
      %v1360 = vmax.f32 %v1280, %v1326
      %v1361 = vmax.f32 %v1281, %v1328
      %v1362 = vmax.f32 %v1282, %v1330
      %1379 = vrot.lane.b32.xlu0 %v1347, 96
      %v1380 = vpop.permute.xlu0 %1379
      %1381 = vrot.lane.b32.xlu0 %v1348, 96
      %v1382 = vpop.permute.xlu0 %1381
      %1383 = vrot.lane.b32.xlu0 %v1349, 96
      %v1384 = vpop.permute.xlu0 %1383
      %1385 = vrot.lane.b32.xlu0 %v1350, 96
      %v1386 = vpop.permute.xlu0 %1385
      %1387 = vrot.lane.b32.xlu0 %v1351, 96
      %v1388 = vpop.permute.xlu0 %1387
      %1389 = vrot.lane.b32.xlu0 %v1352, 96
      %v1390 = vpop.permute.xlu0 %1389
      %1391 = vrot.lane.b32.xlu0 %v1353, 96
      %v1392 = vpop.permute.xlu0 %1391
      %1393 = vrot.lane.b32.xlu0 %v1354, 96
      %v1394 = vpop.permute.xlu0 %1393
      %1395 = vrot.lane.b32.xlu0 %v1355, 96
      %v1396 = vpop.permute.xlu0 %1395
      %1397 = vrot.lane.b32.xlu0 %v1356, 96
      %v1398 = vpop.permute.xlu0 %1397
      %1399 = vrot.lane.b32.xlu0 %v1357, 96
      %v1400 = vpop.permute.xlu0 %1399
      %1401 = vrot.lane.b32.xlu0 %v1358, 96
      %v1402 = vpop.permute.xlu0 %1401
      %1403 = vrot.lane.b32.xlu0 %v1359, 96
      %v1404 = vpop.permute.xlu0 %1403
      %1405 = vrot.lane.b32.xlu0 %v1360, 96
      %v1406 = vpop.permute.xlu0 %1405
      %1407 = vrot.lane.b32.xlu0 %v1361, 96
      %v1408 = vpop.permute.xlu0 %1407
      %1409 = vrot.lane.b32.xlu0 %v1362, 96
      %v1410 = vpop.permute.xlu0 %1409
      %v1427 = vmax.f32 %v1347, %v1380
      %v1428 = vmax.f32 %v1348, %v1382
      %v1429 = vmax.f32 %v1349, %v1384
      %v1430 = vmax.f32 %v1350, %v1386
      %v1431 = vmax.f32 %v1351, %v1388
      %v1432 = vmax.f32 %v1352, %v1390
      %v1433 = vmax.f32 %v1353, %v1392
      %v1434 = vmax.f32 %v1354, %v1394
      %v1435 = vmax.f32 %v1355, %v1396
      %v1436 = vmax.f32 %v1356, %v1398
      %v1437 = vmax.f32 %v1357, %v1400
      %v1438 = vmax.f32 %v1358, %v1402
      %v1439 = vmax.f32 %v1359, %v1404
      %v1440 = vmax.f32 %v1360, %v1406
      %v1441 = vmax.f32 %v1361, %v1408
      %v1442 = vmax.f32 %v1362, %v1410
      %vm1443 = vcmask 130048
      %1444 = vst.msk [vmem:[%s197] sm:$0xff] %vm1443, %v1427
      %1445 = vst.msk [vmem:[%s197 + $0x8] sm:$0xff] %vm1443, %v1428
      %1446 = vst.msk [vmem:[%s197 + $0x10] sm:$0xff] %vm1443, %v1429
      %1447 = vst.msk [vmem:[%s197 + $0x18] sm:$0xff] %vm1443, %v1430
      %1448 = vst.msk [vmem:[%s197 + $0x20] sm:$0xff] %vm1443, %v1431
      %1449 = vst.msk [vmem:[%s197 + $0x28] sm:$0xff] %vm1443, %v1432
      %1450 = vst.msk [vmem:[%s197 + $0x30] sm:$0xff] %vm1443, %v1433
      %1451 = vst.msk [vmem:[%s197 + $0x38] sm:$0xff] %vm1443, %v1434
      %1452 = vst.msk [vmem:[%s197 + $0x40] sm:$0xff] %vm1443, %v1435
      %1453 = vst.msk [vmem:[%s197 + $0x48] sm:$0xff] %vm1443, %v1436
      %1454 = vst.msk [vmem:[%s197 + $0x50] sm:$0xff] %vm1443, %v1437
      %1455 = vst.msk [vmem:[%s197 + $0x58] sm:$0xff] %vm1443, %v1438
      %1456 = vst.msk [vmem:[%s197 + $0x60] sm:$0xff] %vm1443, %v1439
      %1457 = vst.msk [vmem:[%s197 + $0x68] sm:$0xff] %vm1443, %v1440
      %1458 = vst.msk [vmem:[%s197 + $0x70] sm:$0xff] %vm1443, %v1441
      %1459 = vst.msk [vmem:[%s197 + $0x78] sm:$0xff] %vm1443, %v1442
      %p1460 = scmp.lt.s32.totalorder %s15, 1
      %s1461 = scalar_select %p1460, %s15, 1
      %s1462 = smul.addr %s1461, 16
      %s1463 = smul.addr %s1462, 8
      %s1464 = scalar_lea.vmem %s4, %s1463
      // Predicated region
      $region37: #{spafe_forward.5} parent=35 // pred_check
        %p1465 = pneg %p122
      $region38: #{spafe_forward.5} parent=35 // pred_check_branch
        %1467 = sbr.rel (%p1465) target = $region40
      $region39: #{spafe_forward.5} parent=35 // pred_region
        _
      $region40: #{spafe_forward.5} parent=35 // pred_fallthru
        _
    $region36: #{spafe_forward.5} parent=5 // pred_fallthru
      _
    %p1468 = scmp.le.s32.totalorder 2, %s10
    // Predicated region
    $region41: #{spafe_forward.5} parent=5 // pred_check
      %p1469 = pneg %p1468
    $region42: #{spafe_forward.5} parent=5 // pred_check_branch
      %1471 = sbr.rel (%p1469) target = $region44
    $region43: #{spafe_forward.5} parent=5 // pred_region
      %s1472 = ssub.s32 %s10, 2
      // Predicated region
      $region45: #{spafe_forward.5} parent=43 // pred_check
        %p1473 = pneg %p128
      $region46: #{spafe_forward.5} parent=43 // pred_check_branch
        %1475 = sbr.rel (%p1473) target = $region48
      $region47: #{spafe_forward.5} parent=43 // pred_region
        %p1476 = scmp.lt.s32.totalorder %s16, 1
        %s1477 = scalar_select %p1476, %s16, 1
        %s1478 = smul.addr %s1477, 16
        %s1479 = smul.addr %s1478, 8
        %s1480 = scalar_lea.vmem %s4, %s1479
      $region48: #{spafe_forward.5} parent=43 // pred_fallthru
        _
    $region44: #{spafe_forward.5} parent=5 // pred_fallthru
      _
  $region6: #{spafe_forward.5} parent=0 // loop_footer
    %s14 = sadd.s32 1, %s10
  $region7: #{spafe_forward.5} parent=0 // loop_footer_branch
    %9 = sbr.rel target = $region3
  $region8: #{spafe_forward.5} parent=0 // loop_exit
    _

// kernel: spafe_forward.3
$region0: #{spafe_forward.3}
  #allocation0 [shape = 'u32[]', space=smem, size = 0x4, offset = 0x4, fixed_abs, tag = 'smem constant byte address 0x4 - core index']
  #allocation1 [shape = 'u32[144,128]{1,0:T(1,128)}', space=vmem, size = 0x12000, scoped, tag = 'internal scratch']
  %s0 = inlined_call_operand.vmem [shape: bf16[2,32,256], index: 0, kind: input, shape index: {}]
  %s1 = inlined_call_operand.vmem [shape: bf16[32,32], index: 1, kind: input, shape index: {}]
  %s2 = inlined_call_operand.vmem [shape: f32[32,1], index: 2, kind: input, shape index: {}]
  %s3 = inlined_call_operand.vmem [shape: f32[32,1], index: 3, kind: input, shape index: {}]
  %s4 = inlined_call_operand.vmem [shape: f32[2,32,256], index: 4, kind: output, shape index: {}]
  %s5 = sld [smem:[#allocation0]]
  $region49: #{spafe_forward.3} parent=0
    _
  %s7 = ssub.s32 1, %s5
  %s8 = scalar_select 0, %s7, %s5
  loop: start=0, step=1, limit=4
  $region2: #{spafe_forward.3} parent=0 // loop_pre_header
    _
  $region3: #{spafe_forward.3} parent=0 // loop_header
    %s10 = sphi 0, %s14
    %p11 = scmp.ge.s32.totalorder %s10, 4
    %s20 = sphi 0, %s22
    %s23 = sphi 0, %s20
    %s24 = sphi 0, %s23
    %s40 = sphi 0, %s24
    %s44 = sphi 0, %s44
    %s46 = sphi 0, %s44
    %s47 = sphi 0, %s46
    %s61 = sphi 0, %s47
    %s65 = sphi 0, %s65
    %s67 = sphi 0, %s65
    %s68 = sphi 0, %s67
    %s82 = sphi 0, %s68
    %s86 = sphi 0, %s86
    %s88 = sphi 0, %s86
    %s89 = sphi 0, %s88
    %s103 = sphi 0, %s89
    %s109 = sphi 0, %s111
    %s112 = sphi 0, %s109
    %s113 = sphi 0, %s112
    %s129 = sphi 0, %s113
  $region4: #{spafe_forward.3} parent=0 // loop_header_branch
    %13 = sbr.rel (%p11) target = $region8
  $region5: #{spafe_forward.3} parent=0 // loop_body
    %s15 = ssub.s32 %s10, 1
    %s16 = ssub.s32 %s10, 2
    %s17 = sadd.s32 %s10, 1
    %s18 = ssub.s32 %s10, %s17
    %p19 = scmp.eq.s32.totalorder %s18, 0
    %s21 = sadd.s32 %s20, 1
    %s22 = scalar_select %p19, %s20, %s21
    %p25 = pneg %p19
    %p26 = scmp.eq.s32.totalorder %s10, 1
    %p27 = por %p25, %p26
    %p28 = scmp.ne.s32.totalorder %s20, %s23
    %p29 = scmp.eq.s32.totalorder %s10, 0
    %p30 = por %p28, %p29
    %p31 = scmp.ne.s32.totalorder %s20, %s23
    %p32 = scmp.eq.s32.totalorder %s15, 1
    %p33 = por %p31, %p32
    %p34 = scmp.ne.s32.totalorder %s23, %s24
    %p35 = scmp.eq.s32.totalorder %s15, 0
    %p36 = por %p34, %p35
    %p37 = scmp.ne.s32.totalorder %s23, %s24
    %p38 = scmp.eq.s32.totalorder %s16, 1
    %p39 = por %p37, %p38
    %p41 = scmp.ne.s32.totalorder %s24, %s40
    %p42 = scmp.eq.s32.totalorder %s16, 0
    %p43 = por %p41, %p42
    %s45 = sadd.s32 %s44, 1
    %p48 = scmp.eq.s32.totalorder %s10, 1
    %p49 = scmp.ne.s32.totalorder %s44, %s46
    %p50 = scmp.eq.s32.totalorder %s10, 0
    %p51 = por %p49, %p50
    %p52 = scmp.ne.s32.totalorder %s44, %s46
    %p53 = scmp.eq.s32.totalorder %s15, 1
    %p54 = por %p52, %p53
    %p55 = scmp.ne.s32.totalorder %s46, %s47
    %p56 = scmp.eq.s32.totalorder %s15, 0
    %p57 = por %p55, %p56
    %p58 = scmp.ne.s32.totalorder %s46, %s47
    %p59 = scmp.eq.s32.totalorder %s16, 1
    %p60 = por %p58, %p59
    %p62 = scmp.ne.s32.totalorder %s47, %s61
    %p63 = scmp.eq.s32.totalorder %s16, 0
    %p64 = por %p62, %p63
    %s66 = sadd.s32 %s65, 1
    %p69 = scmp.eq.s32.totalorder %s10, 1
    %p70 = scmp.ne.s32.totalorder %s65, %s67
    %p71 = scmp.eq.s32.totalorder %s10, 0
    %p72 = por %p70, %p71
    %p73 = scmp.ne.s32.totalorder %s65, %s67
    %p74 = scmp.eq.s32.totalorder %s15, 1
    %p75 = por %p73, %p74
    %p76 = scmp.ne.s32.totalorder %s67, %s68
    %p77 = scmp.eq.s32.totalorder %s15, 0
    %p78 = por %p76, %p77
    %p79 = scmp.ne.s32.totalorder %s67, %s68
    %p80 = scmp.eq.s32.totalorder %s16, 1
    %p81 = por %p79, %p80
    %p83 = scmp.ne.s32.totalorder %s68, %s82
    %p84 = scmp.eq.s32.totalorder %s16, 0
    %p85 = por %p83, %p84
    %s87 = sadd.s32 %s86, 1
    %p90 = scmp.eq.s32.totalorder %s10, 1
    %p91 = scmp.ne.s32.totalorder %s86, %s88
    %p92 = scmp.eq.s32.totalorder %s10, 0
    %p93 = por %p91, %p92
    %p94 = scmp.ne.s32.totalorder %s86, %s88
    %p95 = scmp.eq.s32.totalorder %s15, 1
    %p96 = por %p94, %p95
    %p97 = scmp.ne.s32.totalorder %s88, %s89
    %p98 = scmp.eq.s32.totalorder %s15, 0
    %p99 = por %p97, %p98
    %p100 = scmp.ne.s32.totalorder %s88, %s89
    %p101 = scmp.eq.s32.totalorder %s16, 1
    %p102 = por %p100, %p101
    %p104 = scmp.ne.s32.totalorder %s89, %s103
    %p105 = scmp.eq.s32.totalorder %s16, 0
    %p106 = por %p104, %p105
    %s107 = ssub.s32 %s10, %s17
    %p108 = scmp.eq.s32.totalorder %s107, 0
    %s110 = sadd.s32 %s109, 1
    %s111 = scalar_select %p108, %s109, %s110
    %p114 = pneg %p108
    %p115 = scmp.eq.s32.totalorder %s10, 1
    %p116 = por %p114, %p115
    %p117 = scmp.ne.s32.totalorder %s109, %s112
    %p118 = scmp.eq.s32.totalorder %s10, 0
    %p119 = por %p117, %p118
    %p120 = scmp.ne.s32.totalorder %s109, %s112
    %p121 = scmp.eq.s32.totalorder %s15, 1
    %p122 = por %p120, %p121
    %p123 = scmp.ne.s32.totalorder %s112, %s113
    %p124 = scmp.eq.s32.totalorder %s15, 0
    %p125 = por %p123, %p124
    %p126 = scmp.ne.s32.totalorder %s112, %s113
    %p127 = scmp.eq.s32.totalorder %s16, 1
    %p128 = por %p126, %p127
    %p130 = scmp.ne.s32.totalorder %s113, %s129
    %p131 = scmp.eq.s32.totalorder %s16, 0
    %p132 = por %p130, %p131
    %p133 = scmp.le.s32.totalorder 1, %s10
    %p134 = scmp.lt.s32.totalorder %s10, 3
    %p135 = pnand %p133, %p134
    %p136 = pneg %p135
    // Predicated region
    $region9: #{spafe_forward.3} parent=5 // pred_check
      _
    $region10: #{spafe_forward.3} parent=5 // pred_check_branch
      %138 = sbr.rel (%p135) target = $region12
    $region11: #{spafe_forward.3} parent=5 // pred_region
      %s139 = ssub.s32 %s10, 1
      // Predicated region
      $region13: #{spafe_forward.3} parent=11 // pred_check
        %p140 = pneg %p57
      $region14: #{spafe_forward.3} parent=11 // pred_check_branch
        %142 = sbr.rel (%p140) target = $region16
      $region15: #{spafe_forward.3} parent=11 // pred_region
        _
      $region16: #{spafe_forward.3} parent=11 // pred_fallthru
        _
      // Predicated region
      $region17: #{spafe_forward.3} parent=11 // pred_check
        %p143 = pneg %p78
      $region18: #{spafe_forward.3} parent=11 // pred_check_branch
        %145 = sbr.rel (%p143) target = $region20
      $region19: #{spafe_forward.3} parent=11 // pred_region
        _
      $region20: #{spafe_forward.3} parent=11 // pred_fallthru
        _
      // Predicated region
      $region21: #{spafe_forward.3} parent=11 // pred_check
        %p146 = pneg %p99
      $region22: #{spafe_forward.3} parent=11 // pred_check_branch
        %148 = sbr.rel (%p146) target = $region24
      $region23: #{spafe_forward.3} parent=11 // pred_region
        _
      $region24: #{spafe_forward.3} parent=11 // pred_fallthru
        _
    $region12: #{spafe_forward.3} parent=5 // pred_fallthru
      _
    %p149 = scmp.lt.s32.totalorder %s10, 2
    // Predicated region
    $region25: #{spafe_forward.3} parent=5 // pred_check
      %p150 = pneg %p149
    $region26: #{spafe_forward.3} parent=5 // pred_check_branch
      %152 = sbr.rel (%p150) target = $region28
    $region27: #{spafe_forward.3} parent=5 // pred_region
      // Predicated region
      $region29: #{spafe_forward.3} parent=27 // pred_check
        %p153 = pneg %p30
      $region30: #{spafe_forward.3} parent=27 // pred_check_branch
        %155 = sbr.rel (%p153) target = $region32
      $region31: #{spafe_forward.3} parent=27 // pred_region
        %p156 = scmp.lt.s32.totalorder %s10, 1
        %s157 = scalar_select %p156, %s10, 1
        %s158 = smul.addr %s157, 8
        %s159 = smul.addr %s158, 4
        %s160 = scalar_lea.vmem %s0, %s159
      $region32: #{spafe_forward.3} parent=27 // pred_fallthru
        _
    $region28: #{spafe_forward.3} parent=5 // pred_fallthru
      _
    %p161 = scmp.le.s32.totalorder 1, %s10
    %p162 = scmp.lt.s32.totalorder %s10, 3
    %p163 = pnand %p161, %p162
    %p164 = pneg %p163
    // Predicated region
    $region33: #{spafe_forward.3} parent=5 // pred_check
      _
    $region34: #{spafe_forward.3} parent=5 // pred_check_branch
      %166 = sbr.rel (%p163) target = $region36
    $region35: #{spafe_forward.3} parent=5 // pred_region
      %s167 = ssub.s32 %s10, 1
      %p168 = scmp.lt.s32.totalorder %s15, 1
      %s169 = scalar_select %p168, %s15, 1
      %s170 = smul.addr %s169, 8
      %s171 = smul.addr %s170, 4
      %s172 = scalar_lea.vmem %s0, %s171
      %p173 = pneg %p36
      %p174 = pneg %p33
      %p175 = pneg %p57
      %p176 = pneg %p54
      %p177 = pneg %p78
      %p178 = pneg %p75
      %p179 = pneg %p99
      %p180 = pneg %p96
      %p181 = pneg %p125
      %p182 = pneg %p122
      %p183 = scmp.lt.s32.totalorder %s15, 1
      %s184 = scalar_select %p183, %s15, 1
      %s185 = smul.addr %s184, 8
      %s186 = smul.addr %s185, 8
      %s187 = scalar_lea.vmem %s4, %s186
      %p188 = scmp.lt.s32.totalorder %s15, 1
      %s189 = scalar_select %p188, %s15, 1
      %s190 = smul.addr %s189, 8
      %s191 = smul.addr %s190, 4
      %s192 = scalar_lea.vmem %s0, %s191
      %p193 = scmp.lt.s32.totalorder %s15, 1
      %s194 = scalar_select %p193, %s15, 1
      %s195 = smul.addr %s194, 8
      %s196 = smul.addr %s195, 8
      %s197 = scalar_lea.vmem %s4, %s196
      %v199 = vld [vmem:[%s1] sm:$0xf]
      %v200 = vld [vmem:[%s1 + $0x4] sm:$0xf]
      %v201 = vld [vmem:[%s1 + $0x8] sm:$0xf]
      %v202 = vld [vmem:[%s1 + $0xc] sm:$0xf]
      %v203 = vld [vmem:[%s192] sm:$0xff]
      %v204 = vld [vmem:[%s192 + $0x8] sm:$0xff]
      %v205 = vld [vmem:[%s192 + $0x10] sm:$0xff]
      %v206 = vld [vmem:[%s192 + $0x18] sm:$0xff]
      %v211 = vunpack.c.l.b16 %v199
      %v212 = vunpack.c.l.b16 %v200
      %v213 = vunpack.c.l.b16 %v201
      %v214 = vunpack.c.l.b16 %v202
      %v215 = vpack.c.b16 %v212, %v211
      %v216 = vpack.c.b16 %v214, %v213
      %v221 = vunpack.c.l.b16 %v203
      %v222 = vunpack.c.h.b16 %v203
      %v223 = vunpack.c.l.b16 %v204
      %v224 = vunpack.c.h.b16 %v204
      %v225 = vunpack.c.l.b16 %v205
      %v226 = vunpack.c.h.b16 %v205
      %v227 = vunpack.c.l.b16 %v206
      %v228 = vunpack.c.h.b16 %v206
      %v229 = vpack.c.b16 %v223, %v221
      %v230 = vpack.c.b16 %v224, %v222
      %v231 = vpack.c.b16 %v227, %v225
      %v232 = vpack.c.b16 %v228, %v226
      %vm237 = vcmask 261120
      %v239 = vsel %vm237, %v215, 0
      %v242 = vsel %vm237, %v216, 0
      %244 = vmatprep.subr.bf16.mxu0 %v230
      %245 = vmatpush1.bf16.msra.mxu0 %v229
      %246 = vmatprep.subr.bf16.mxu0 %v232
      %247 = vmatpush1.bf16.msra.mxu0 %v231
      %248 = vmatprep.subr.bf16.mxu0 0
      %249 = vmatpush1.bf16.msra.mxu0 0
      %250 = vmatprep.subr.bf16.mxu0 0
      %251 = vmatpush1.bf16.msra.mxu0 0
      %252 = vmatprep.subr.bf16.mxu0 0
      %253 = vmatpush1.bf16.msra.mxu0 0
      %254 = vmatprep.subr.bf16.mxu0 0
      %255 = vmatpush1.bf16.msra.mxu0 0
      %256 = vmatprep.subr.bf16.mxu0 0
      %257 = vmatpush1.bf16.msra.mxu0 0
      %258 = vmatprep.subr.bf16.mxu0 0
      %259 = vmatpush1.bf16.msra.mxu0 0
      %260 = vmatprep.subr.bf16.mxu0 0
      %261 = vmatpush1.bf16.msra.mxu0 0
      %262 = vmatprep.subr.bf16.mxu0 0
      %263 = vmatpush1.bf16.msra.mxu0 0
      %264 = vmatprep.subr.bf16.mxu0 0
      %265 = vmatpush1.bf16.msra.mxu0 0
      %266 = vmatprep.subr.bf16.mxu0 0
      %267 = vmatpush1.bf16.msra.mxu0 0
      %268 = vmatprep.subr.bf16.mxu0 0
      %269 = vmatpush1.bf16.msra.mxu0 0
      %270 = vmatprep.subr.bf16.mxu0 0
      %271 = vmatpush1.bf16.msra.mxu0 0
      %272 = vmatprep.subr.bf16.mxu0 0
      %273 = vmatpush1.bf16.msra.mxu0 0
      %274 = vmatprep.subr.bf16.mxu0 0
      %275 = vmatpush1.bf16.msra.mxu0 0
      %276 = vmatprep.mubr.bf16.mxu0 0
      %277 = vmatmul.mubr.bf16.gmra.mrb[0].mxu0 %v239
      %v278 = vpop.f32.mrb[0].mxu0
      %v279 = vadd.f32 0.0, %v278
      %v280 = vpop.f32.mrb[0].mxu0
      %v281 = vadd.f32 0.0, %v280
      %v282 = vpop.f32.mrb[0].mxu0
      %v283 = vadd.f32 0.0, %v282
      %v284 = vpop.f32.mrb[0].mxu0
      %v285 = vadd.f32 0.0, %v284
      %286 = vmatprep.mubr.bf16.mxu0 0
      %287 = vmatmul.mubr.bf16.gmra.mrb[0].mxu0 %v242
      %v288 = vpop.f32.mrb[0].mxu0
      %v289 = vadd.f32 0.0, %v288
      %v290 = vpop.f32.mrb[0].mxu0
      %v291 = vadd.f32 0.0, %v290
      %v292 = vpop.f32.mrb[0].mxu0
      %v293 = vadd.f32 0.0, %v292
      %v294 = vpop.f32.mrb[0].mxu0
      %v295 = vadd.f32 0.0, %v294
      %296 = vdwg.mxu0
      %v297 = vld [vmem:[%s2] sm:$0xff]
      %v298 = vld [vmem:[%s2 + $0x8] sm:$0xff]
      %v299 = vld [vmem:[%s2 + $0x10] sm:$0xff]
      %v300 = vld [vmem:[%s2 + $0x18] sm:$0xff]
      %302 = vset.pattern.permute.xlu0 0
      %303 = vperm.xlu0 %302, %v297
      %v304 = vpop.permute.xlu0 %303
      %307 = vset.pattern.permute.xlu0 0
      %308 = vperm.xlu0 %307, %v298
      %v309 = vpop.permute.xlu0 %308
      %312 = vset.pattern.permute.xlu0 0
      %313 = vperm.xlu0 %312, %v299
      %v314 = vpop.permute.xlu0 %313
      %317 = vset.pattern.permute.xlu0 0
      %318 = vperm.xlu0 %317, %v300
      %v319 = vpop.permute.xlu0 %318
      %v321 = vmul.f32 %v279, %v304
      %v322 = vmul.f32 %v281, %v304
      %v323 = vmul.f32 %v283, %v309
      %v324 = vmul.f32 %v285, %v309
      %v325 = vmul.f32 %v289, %v314
      %v326 = vmul.f32 %v291, %v314
      %v327 = vmul.f32 %v293, %v319
      %v328 = vmul.f32 %v295, %v319
      %v329 = vld [vmem:[%s3] sm:$0xff]
      %v330 = vld [vmem:[%s3 + $0x8] sm:$0xff]
      %v331 = vld [vmem:[%s3 + $0x10] sm:$0xff]
      %v332 = vld [vmem:[%s3 + $0x18] sm:$0xff]
      %334 = vset.pattern.permute.xlu0 0
      %335 = vperm.xlu0 %334, %v329
      %v336 = vpop.permute.xlu0 %335
      %339 = vset.pattern.permute.xlu0 0
      %340 = vperm.xlu0 %339, %v330
      %v341 = vpop.permute.xlu0 %340
      %344 = vset.pattern.permute.xlu0 0
      %345 = vperm.xlu0 %344, %v331
      %v346 = vpop.permute.xlu0 %345
      %349 = vset.pattern.permute.xlu0 0
      %350 = vperm.xlu0 %349, %v332
      %v351 = vpop.permute.xlu0 %350
      %v353 = vadd.f32 %v321, %v336
      %v354 = vadd.f32 %v322, %v336
      %v355 = vadd.f32 %v323, %v341
      %v356 = vadd.f32 %v324, %v341
      %v357 = vadd.f32 %v325, %v346
      %v358 = vadd.f32 %v326, %v346
      %v359 = vadd.f32 %v327, %v351
      %v360 = vadd.f32 %v328, %v351
      %v361 = vmax.f32 %v353, 0.0
      %v362 = vmax.f32 %v354, 0.0
      %v363 = vmax.f32 %v355, 0.0
      %v364 = vmax.f32 %v356, 0.0
      %v365 = vmax.f32 %v357, 0.0
      %v366 = vmax.f32 %v358, 0.0
      %v367 = vmax.f32 %v359, 0.0
      %v368 = vmax.f32 %v360, 0.0
      %369 = vst [vmem:[%s197] sm:$0xff] %v361
      %370 = vst [vmem:[%s197 + $0x8] sm:$0xff] %v362
      %371 = vst [vmem:[%s197 + $0x10] sm:$0xff] %v363
      %372 = vst [vmem:[%s197 + $0x18] sm:$0xff] %v364
      %373 = vst [vmem:[%s197 + $0x20] sm:$0xff] %v365
      %374 = vst [vmem:[%s197 + $0x28] sm:$0xff] %v366
      %375 = vst [vmem:[%s197 + $0x30] sm:$0xff] %v367
      %376 = vst [vmem:[%s197 + $0x38] sm:$0xff] %v368
      %p377 = scmp.lt.s32.totalorder %s15, 1
      %s378 = scalar_select %p377, %s15, 1
      %s379 = smul.addr %s378, 8
      %s380 = smul.addr %s379, 8
      %s381 = scalar_lea.vmem %s4, %s380
      // Predicated region
      $region37: #{spafe_forward.3} parent=35 // pred_check
        %p382 = pneg %p122
      $region38: #{spafe_forward.3} parent=35 // pred_check_branch
        %384 = sbr.rel (%p382) target = $region40
      $region39: #{spafe_forward.3} parent=35 // pred_region
        _
      $region40: #{spafe_forward.3} parent=35 // pred_fallthru
        _
    $region36: #{spafe_forward.3} parent=5 // pred_fallthru
      _
    %p385 = scmp.le.s32.totalorder 2, %s10
    // Predicated region
    $region41: #{spafe_forward.3} parent=5 // pred_check
      %p386 = pneg %p385
    $region42: #{spafe_forward.3} parent=5 // pred_check_branch
      %388 = sbr.rel (%p386) target = $region44
    $region43: #{spafe_forward.3} parent=5 // pred_region
      %s389 = ssub.s32 %s10, 2
      // Predicated region
      $region45: #{spafe_forward.3} parent=43 // pred_check
        %p390 = pneg %p128
      $region46: #{spafe_forward.3} parent=43 // pred_check_branch
        %392 = sbr.rel (%p390) target = $region48
      $region47: #{spafe_forward.3} parent=43 // pred_region
        %p393 = scmp.lt.s32.totalorder %s16, 1
        %s394 = scalar_select %p393, %s16, 1
        %s395 = smul.addr %s394, 8
        %s396 = smul.addr %s395, 8
        %s397 = scalar_lea.vmem %s4, %s396
      $region48: #{spafe_forward.3} parent=43 // pred_fallthru
        _
    $region44: #{spafe_forward.3} parent=5 // pred_fallthru
      _
  $region6: #{spafe_forward.3} parent=0 // loop_footer
    %s14 = sadd.s32 1, %s10
  $region7: #{spafe_forward.3} parent=0 // loop_footer_branch
    %9 = sbr.rel target = $region3
  $region8: #{spafe_forward.3} parent=0 // loop_exit
    _

</llo_original>
